<compile_context>
chip_gen: v6e
topology: v6e:2x2x1
jax: 0.10.0
libtpu: 0.0.40
codegen_flags: <defaults>
</compile_context>

<pallas_src>
import jax
import jax.numpy as jnp
from jax.experimental import pallas as pl
from jax.experimental.pallas import tpu as pltpu


# ---------------------------------------------------------------------------
# Kernel 1: 3x3 conv (stride 1, pre-padded input) as ONE im2col matmul,
# plus per-batch partial channel sum / sum-of-squares (for train-mode BN).
# ---------------------------------------------------------------------------
def conv_stats_kernel(xp_ref, w_ref, y_ref, sum_ref, ssq_ref):
    # xp_ref : (1, H+2, W+2, Cin)  bf16 padded input, one batch element
    # w_ref  : (9*Cin, Cout)       bf16 im2col-folded weights (kh, kw, cin)-major
    # y_ref  : (1, H, W, Cout)     bf16 conv output for this batch element
    # sum_ref/ssq_ref : (1, 1, Cout) f32 per-batch partial stats
    _, H, W, Cout = y_ref.shape
    Cin = xp_ref.shape[-1]

    # Build im2col slab once: 9 shifted taps concatenated on the channel axis.
    taps = [xp_ref[0, kh:kh + H, kw:kw + W, :]
            for kh in range(3) for kw in range(3)]          # each (H, W, Cin)
    slab = jnp.concatenate(taps, axis=-1).reshape(H * W, 9 * Cin)

    # Single MXU contraction, f32 accumulation.
    acc = jnp.dot(slab, w_ref[...], preferred_element_type=jnp.float32)

    y_ref[...] = acc.reshape(1, H, W, Cout).astype(y_ref.dtype)

    # Per-batch partial statistics from the f32 accumulator (reduced in JAX).
    sum_ref[...] = jnp.sum(acc, axis=0).reshape(1, 1, Cout)
    ssq_ref[...] = jnp.sum(acc * acc, axis=0).reshape(1, 1, Cout)


# ---------------------------------------------------------------------------
# Kernel 2: fused BatchNorm affine (precomputed scale/shift) + ReLU.
# ---------------------------------------------------------------------------
def bn_relu_kernel(y_ref, scale_ref, shift_ref, o_ref):
    y = y_ref[...].astype(jnp.float32)                      # upcast bf16 -> f32
    o_ref[...] = jnp.maximum(y * scale_ref[...] + shift_ref[...], 0.0)


# ---------------------------------------------------------------------------
# Wrapper: ConvX forward (NCHW in / NCHW out, matching the nn.Module)
# ---------------------------------------------------------------------------
@jax.jit
def convx_forward(x_nchw, w_oihw, gamma, beta, eps=1e-5):
    N, Cin, H, W = x_nchw.shape
    Cout = w_oihw.shape[0]

    # NHWC + bf16; pad after the cast so transpose+cast+pad fuse on half bytes.
    x = jnp.transpose(x_nchw, (0, 2, 3, 1)).astype(jnp.bfloat16)
    xp = jnp.pad(x, ((0, 0), (1, 1), (1, 1), (0, 0)))
    # OIHW -> HWIO -> (9*Cin, Cout), matching the in-kernel tap ordering.
    w = jnp.transpose(w_oihw, (2, 3, 1, 0)).reshape(9 * Cin, Cout).astype(jnp.bfloat16)

    conv_out, psum, pssq = pl.pallas_call(
        conv_stats_kernel,
        out_shape=(
            jax.ShapeDtypeStruct((N, H, W, Cout), jnp.bfloat16),
            jax.ShapeDtypeStruct((N, 1, Cout), jnp.float32),
            jax.ShapeDtypeStruct((N, 1, Cout), jnp.float32),
        ),
        grid_spec=pltpu.PrefetchScalarGridSpec(
            num_scalar_prefetch=0,
            grid=(N,),
            in_specs=[
                pl.BlockSpec((1, H + 2, W + 2, Cin), lambda n: (n, 0, 0, 0)),
                pl.BlockSpec((9 * Cin, Cout), lambda n: (0, 0)),
            ],
            out_specs=(
                pl.BlockSpec((1, H, W, Cout), lambda n: (n, 0, 0, 0)),
                pl.BlockSpec((1, 1, Cout), lambda n: (n, 0, 0)),   # per-batch partials
                pl.BlockSpec((1, 1, Cout), lambda n: (n, 0, 0)),
            ),
        ),
        compiler_params=pltpu.CompilerParams(
            dimension_semantics=("parallel",)),                    # no serialized accumulator
    )(xp, w)

    # BatchNorm2d training-mode statistics (biased variance over N*H*W), in f32.
    count = jnp.float32(N * H * W)
    mean = jnp.sum(psum[:, 0, :], axis=0) / count
    var = jnp.sum(pssq[:, 0, :], axis=0) / count - mean * mean
    scale = (gamma.astype(jnp.float32) / jnp.sqrt(var + eps))
    shift = beta.astype(jnp.float32) - mean * scale

    out = pl.pallas_call(
        bn_relu_kernel,
        out_shape=jax.ShapeDtypeStruct((N, H, W, Cout), jnp.float32),
        grid=(N,),
        in_specs=[
            pl.BlockSpec((1, H, W, Cout), lambda n: (n, 0, 0, 0)),
            pl.BlockSpec((1, 1, 1, Cout), lambda n: (0, 0, 0, 0)),
            pl.BlockSpec((1, 1, 1, Cout), lambda n: (0, 0, 0, 0)),
        ],
        out_specs=pl.BlockSpec((1, H, W, Cout), lambda n: (n, 0, 0, 0)),
        compiler_params=pltpu.CompilerParams(
            dimension_semantics=("parallel",)),
    )(conv_out, scale.reshape(1, 1, 1, Cout), shift.reshape(1, 1, 1, Cout))

    return jnp.transpose(out, (0, 3, 1, 2))  # back to NCHW


# ---------------------------------------------------------------------------
# Pure-JAX f32 reference (true module semantics) for correctness check
# ---------------------------------------------------------------------------
def convx_reference(x_nchw, w_oihw, gamma, beta, eps=1e-5):
    x = jnp.transpose(x_nchw, (0, 2, 3, 1)).astype(jnp.float32)
    w = jnp.transpose(w_oihw, (2, 3, 1, 0)).astype(jnp.float32)
    y = jax.lax.conv_general_dilated(
        x, w, window_strides=(1, 1), padding="SAME",
        dimension_numbers=("NHWC", "HWIO", "NHWC"))
    mean = jnp.mean(y, axis=(0, 1, 2))
    var = jnp.mean((y - mean) ** 2, axis=(0, 1, 2))   # biased, train-mode BN
    y = (y - mean) / jnp.sqrt(var + eps) * gamma + beta
    y = jnp.maximum(y, 0.0)
    return jnp.transpose(y, (0, 3, 1, 2))


if __name__ == "__main__":
    key = jax.random.PRNGKey(0)
    k1, k2, k3, k4 = jax.random.split(key, 4)

    N, Cin, H, W = 2, 4, 16, 16
    Cout = 8

    x = jax.random.normal(k1, (N, Cin, H, W), dtype=jnp.float32)
    w = jax.random.normal(k2, (Cout, Cin, 3, 3), dtype=jnp.float32) * 0.1  # Conv2d weight (OIHW)
    gamma = 1.0 + 0.1 * jax.random.normal(k3, (Cout,), dtype=jnp.float32)  # BN weight
    beta = 0.05 * jax.random.normal(k4, (Cout,), dtype=jnp.float32)        # BN bias

    out = convx_forward(x, w, gamma, beta)
    out = jax.block_until_ready(out)

    ref = convx_reference(x, w, gamma, beta)
    assert out.shape == (N, Cout, H, W)
    # Tolerance widened vs a pure-f32 path because inputs/weights and the conv
    # intermediate are bf16 (stats accumulate in f32 inside the kernel).
    err = float(jnp.max(jnp.abs(out - ref)))
    assert jnp.allclose(out, ref, atol=2e-2, rtol=2e-2), err

    print("KERNEL_OK")
</pallas_src>

<mosaic_0001>
module attributes {stable_mosaic.version = 11 : i64} {
  func.func @bn_relu_kernel(%arg0: i32, %arg1: memref<1x16x16x8xbf16, #tpu.memory_space<vmem>>, %arg2: memref<1x1x1x8xf32, #tpu.memory_space<vmem>>, %arg3: memref<1x1x1x8xf32, #tpu.memory_space<vmem>>, %arg4: memref<1x16x16x8xf32, #tpu.memory_space<vmem>>) attributes {dimension_semantics = [#tpu.dimension_semantics<parallel>], iteration_bounds = array<i64: 2>, scalar_prefetch = 0 : i64, scratch_operands = 0 : i64, tpu.core_type = #tpu.core_type<tc>, window_params = [{transform_indices = @transform_0, window_bounds = array<i64: 1, 16, 16, 8>}, {pipeline_mode = #tpu.pipeline_mode<synchronous>, transform_indices = @transform_1, window_bounds = array<i64: 1, 1, 1, 8>}, {pipeline_mode = #tpu.pipeline_mode<synchronous>, transform_indices = @transform_2, window_bounds = array<i64: 1, 1, 1, 8>}, {transform_indices = @transform_3, window_bounds = array<i64: 1, 16, 16, 8>}]} {
    %c0 = arith.constant 0 : index
    %c0_0 = arith.constant 0 : index
    %c0_1 = arith.constant 0 : index
    %c0_2 = arith.constant 0 : index
    %0 = vector.load %arg1[%c0, %c0_0, %c0_1, %c0_2] : memref<1x16x16x8xbf16, #tpu.memory_space<vmem>>, vector<1x16x16x8xbf16>
    %1 = arith.extf %0 : vector<1x16x16x8xbf16> to vector<1x16x16x8xf32>
    %c0_3 = arith.constant 0 : index
    %c0_4 = arith.constant 0 : index
    %c0_5 = arith.constant 0 : index
    %c0_6 = arith.constant 0 : index
    %2 = vector.load %arg2[%c0_3, %c0_4, %c0_5, %c0_6] : memref<1x1x1x8xf32, #tpu.memory_space<vmem>>, vector<1x1x1x8xf32>
    %3 = vector.broadcast %2 : vector<1x1x1x8xf32> to vector<1x16x16x8xf32>
    %4 = arith.mulf %1, %3 : vector<1x16x16x8xf32>
    %c0_7 = arith.constant 0 : index
    %c0_8 = arith.constant 0 : index
    %c0_9 = arith.constant 0 : index
    %c0_10 = arith.constant 0 : index
    %5 = vector.load %arg3[%c0_7, %c0_8, %c0_9, %c0_10] : memref<1x1x1x8xf32, #tpu.memory_space<vmem>>, vector<1x1x1x8xf32>
    %6 = vector.broadcast %5 : vector<1x1x1x8xf32> to vector<1x16x16x8xf32>
    %7 = arith.addf %4, %6 : vector<1x16x16x8xf32>
    %cst = arith.constant 0.000000e+00 : f32
    %8 = vector.broadcast %cst : f32 to vector<1x16x16x8xf32>
    %9 = arith.maximumf %7, %8 : vector<1x16x16x8xf32>
    %c0_11 = arith.constant 0 : index
    %c0_12 = arith.constant 0 : index
    %c0_13 = arith.constant 0 : index
    %c0_14 = arith.constant 0 : index
    %10 = vector.load %arg4[%c0_11, %c0_12, %c0_13, %c0_14] : memref<1x16x16x8xf32, #tpu.memory_space<vmem>>, vector<1x16x16x8xf32>
    tpu.vector_store %arg4[%c0_11, %c0_12, %c0_13, %c0_14], %9 {strides = array<i32>} : memref<1x16x16x8xf32, #tpu.memory_space<vmem>>, vector<1x16x16x8xf32>,
    return
  }
  func.func @transform_0(%arg0: i32) -> (i32, i32, i32, i32) {
    %c0_i32 = arith.constant 0 : i32
    %c0_i32_0 = arith.constant 0 : i32
    %c0_i32_1 = arith.constant 0 : i32
    %c0_i32_2 = arith.constant 0 : i32
    return %arg0, %c0_i32, %c0_i32_0, %c0_i32_1 : i32, i32, i32, i32
  }
  func.func @transform_1(%arg0: i32) -> (i32, i32, i32, i32) {
    %c0_i32 = arith.constant 0 : i32
    %c0_i32_0 = arith.constant 0 : i32
    %c0_i32_1 = arith.constant 0 : i32
    %c0_i32_2 = arith.constant 0 : i32
    %c0_i32_3 = arith.constant 0 : i32
    return %c0_i32, %c0_i32_0, %c0_i32_1, %c0_i32_2 : i32, i32, i32, i32
  }
  func.func @transform_2(%arg0: i32) -> (i32, i32, i32, i32) {
    %c0_i32 = arith.constant 0 : i32
    %c0_i32_0 = arith.constant 0 : i32
    %c0_i32_1 = arith.constant 0 : i32
    %c0_i32_2 = arith.constant 0 : i32
    %c0_i32_3 = arith.constant 0 : i32
    return %c0_i32, %c0_i32_0, %c0_i32_1, %c0_i32_2 : i32, i32, i32, i32
  }
  func.func @transform_3(%arg0: i32) -> (i32, i32, i32, i32) {
    %c0_i32 = arith.constant 0 : i32
    %c0_i32_0 = arith.constant 0 : i32
    %c0_i32_1 = arith.constant 0 : i32
    %c0_i32_2 = arith.constant 0 : i32
    return %arg0, %c0_i32, %c0_i32_0, %c0_i32_1 : i32, i32, i32, i32
  }
}

module attributes {stable_mosaic.version = 11 : i64} {
  func.func @conv_stats_kernel(%arg0: i32, %arg1: memref<1x18x18x4xbf16, #tpu.memory_space<vmem>>, %arg2: memref<36x8xbf16, #tpu.memory_space<vmem>>, %arg3: memref<1x16x16x8xbf16, #tpu.memory_space<vmem>>, %arg4: memref<1x1x8xf32, #tpu.memory_space<vmem>>, %arg5: memref<1x1x8xf32, #tpu.memory_space<vmem>>) attributes {dimension_semantics = [#tpu.dimension_semantics<parallel>], iteration_bounds = array<i64: 2>, scalar_prefetch = 0 : i64, scratch_operands = 0 : i64, tpu.core_type = #tpu.core_type<tc>, window_params = [{transform_indices = @transform_0, window_bounds = array<i64: 1, 18, 18, 4>}, {pipeline_mode = #tpu.pipeline_mode<synchronous>, transform_indices = @transform_1, window_bounds = array<i64: 36, 8>}, {transform_indices = @transform_2, window_bounds = array<i64: 1, 16, 16, 8>}, {transform_indices = @transform_3, window_bounds = array<i64: 1, 1, 8>}, {transform_indices = @transform_4, window_bounds = array<i64: 1, 1, 8>}]} {
    %c0 = arith.constant 0 : index
    %c0_0 = arith.constant 0 : index
    %c0_1 = arith.constant 0 : index
    %c0_2 = arith.constant 0 : index
    %0 = vector.load %arg1[%c0, %c0_0, %c0_1, %c0_2] : memref<1x18x18x4xbf16, #tpu.memory_space<vmem>>, vector<1x16x16x4xbf16>
    %1 = vector.shape_cast %0 : vector<1x16x16x4xbf16> to vector<16x16x4xbf16>
    %c0_3 = arith.constant 0 : index
    %c0_4 = arith.constant 0 : index
    %c1 = arith.constant 1 : index
    %c0_5 = arith.constant 0 : index
    %2 = vector.load %arg1[%c0_3, %c0_4, %c1, %c0_5] : memref<1x18x18x4xbf16, #tpu.memory_space<vmem>>, vector<1x16x16x4xbf16>
    %3 = vector.shape_cast %2 : vector<1x16x16x4xbf16> to vector<16x16x4xbf16>
    %c0_6 = arith.constant 0 : index
    %c0_7 = arith.constant 0 : index
    %c2 = arith.constant 2 : index
    %c0_8 = arith.constant 0 : index
    %4 = vector.load %arg1[%c0_6, %c0_7, %c2, %c0_8] : memref<1x18x18x4xbf16, #tpu.memory_space<vmem>>, vector<1x16x16x4xbf16>
    %5 = vector.shape_cast %4 : vector<1x16x16x4xbf16> to vector<16x16x4xbf16>
    %c0_9 = arith.constant 0 : index
    %c1_10 = arith.constant 1 : index
    %c0_11 = arith.constant 0 : index
    %c0_12 = arith.constant 0 : index
    %6 = vector.load %arg1[%c0_9, %c1_10, %c0_11, %c0_12] : memref<1x18x18x4xbf16, #tpu.memory_space<vmem>>, vector<1x16x16x4xbf16>
    %7 = vector.shape_cast %6 : vector<1x16x16x4xbf16> to vector<16x16x4xbf16>
    %c0_13 = arith.constant 0 : index
    %c1_14 = arith.constant 1 : index
    %c1_15 = arith.constant 1 : index
    %c0_16 = arith.constant 0 : index
    %8 = vector.load %arg1[%c0_13, %c1_14, %c1_15, %c0_16] : memref<1x18x18x4xbf16, #tpu.memory_space<vmem>>, vector<1x16x16x4xbf16>
    %9 = vector.shape_cast %8 : vector<1x16x16x4xbf16> to vector<16x16x4xbf16>
    %c0_17 = arith.constant 0 : index
    %c1_18 = arith.constant 1 : index
    %c2_19 = arith.constant 2 : index
    %c0_20 = arith.constant 0 : index
    %10 = vector.load %arg1[%c0_17, %c1_18, %c2_19, %c0_20] : memref<1x18x18x4xbf16, #tpu.memory_space<vmem>>, vector<1x16x16x4xbf16>
    %11 = vector.shape_cast %10 : vector<1x16x16x4xbf16> to vector<16x16x4xbf16>
    %c0_21 = arith.constant 0 : index
    %c2_22 = arith.constant 2 : index
    %c0_23 = arith.constant 0 : index
    %c0_24 = arith.constant 0 : index
    %12 = vector.load %arg1[%c0_21, %c2_22, %c0_23, %c0_24] : memref<1x18x18x4xbf16, #tpu.memory_space<vmem>>, vector<1x16x16x4xbf16>
    %13 = vector.shape_cast %12 : vector<1x16x16x4xbf16> to vector<16x16x4xbf16>
    %c0_25 = arith.constant 0 : index
    %c2_26 = arith.constant 2 : index
    %c1_27 = arith.constant 1 : index
    %c0_28 = arith.constant 0 : index
    %14 = vector.load %arg1[%c0_25, %c2_26, %c1_27, %c0_28] : memref<1x18x18x4xbf16, #tpu.memory_space<vmem>>, vector<1x16x16x4xbf16>
    %15 = vector.shape_cast %14 : vector<1x16x16x4xbf16> to vector<16x16x4xbf16>
    %c0_29 = arith.constant 0 : index
    %c2_30 = arith.constant 2 : index
    %c2_31 = arith.constant 2 : index
    %c0_32 = arith.constant 0 : index
    %16 = vector.load %arg1[%c0_29, %c2_30, %c2_31, %c0_32] : memref<1x18x18x4xbf16, #tpu.memory_space<vmem>>, vector<1x16x16x4xbf16>
    %17 = vector.shape_cast %16 : vector<1x16x16x4xbf16> to vector<16x16x4xbf16>
    %18 = tpu.concatenate %1, %3, %5, %7, %9, %11, %13, %15, %17 in 2 : vector<16x16x4xbf16>, vector<16x16x4xbf16>, vector<16x16x4xbf16>, vector<16x16x4xbf16>, vector<16x16x4xbf16>, vector<16x16x4xbf16>, vector<16x16x4xbf16>, vector<16x16x4xbf16>, vector<16x16x4xbf16> -> vector<16x16x36xbf16>
    %19 = vector.shape_cast %18 : vector<16x16x36xbf16> to vector<256x36xbf16>
    %c0_33 = arith.constant 0 : index
    %c0_34 = arith.constant 0 : index
    %20 = vector.load %arg2[%c0_33, %c0_34] : memref<36x8xbf16, #tpu.memory_space<vmem>>, vector<36x8xbf16>
    %cst = arith.constant dense<0.000000e+00> : vector<256x8xf32>
    %21 = tpu.matmul %19, %20, %cst {dimension_numbers = #tpu.dot_dimension_numbers<[1], [0], [0], [1], [0, 0, 1, 1], [], []>} : vector<256x36xbf16>, vector<36x8xbf16>, vector<256x8xf32> -> vector<256x8xf32>
    %22 = vector.shape_cast %21 : vector<256x8xf32> to vector<1x16x16x8xf32>
    %23 = arith.truncf %22 : vector<1x16x16x8xf32> to vector<1x16x16x8xbf16>
    %c0_35 = arith.constant 0 : index
    %c0_36 = arith.constant 0 : index
    %c0_37 = arith.constant 0 : index
    %c0_38 = arith.constant 0 : index
    %24 = vector.load %arg3[%c0_35, %c0_36, %c0_37, %c0_38] : memref<1x16x16x8xbf16, #tpu.memory_space<vmem>>, vector<1x16x16x8xbf16>
    tpu.vector_store %arg3[%c0_35, %c0_36, %c0_37, %c0_38], %23 {strides = array<i32>} : memref<1x16x16x8xbf16, #tpu.memory_space<vmem>>, vector<1x16x16x8xbf16>,
    %cst_39 = arith.constant dense<0.000000e+00> : vector<8xf32>
    %25 = vector.multi_reduction <add>, %21, %cst_39 [0] : vector<256x8xf32> to vector<8xf32>
    %26 = vector.shape_cast %25 : vector<8xf32> to vector<1x1x8xf32>
    %c0_40 = arith.constant 0 : index
    %c0_41 = arith.constant 0 : index
    %c0_42 = arith.constant 0 : index
    %27 = vector.load %arg4[%c0_40, %c0_41, %c0_42] : memref<1x1x8xf32, #tpu.memory_space<vmem>>, vector<1x1x8xf32>
    tpu.vector_store %arg4[%c0_40, %c0_41, %c0_42], %26 {strides = array<i32>} : memref<1x1x8xf32, #tpu.memory_space<vmem>>, vector<1x1x8xf32>,
    %28 = arith.mulf %21, %21 : vector<256x8xf32>
    %cst_43 = arith.constant dense<0.000000e+00> : vector<8xf32>
    %29 = vector.multi_reduction <add>, %28, %cst_43 [0] : vector<256x8xf32> to vector<8xf32>
    %30 = vector.shape_cast %29 : vector<8xf32> to vector<1x1x8xf32>
    %c0_44 = arith.constant 0 : index
    %c0_45 = arith.constant 0 : index
    %c0_46 = arith.constant 0 : index
    %31 = vector.load %arg5[%c0_44, %c0_45, %c0_46] : memref<1x1x8xf32, #tpu.memory_space<vmem>>, vector<1x1x8xf32>
    tpu.vector_store %arg5[%c0_44, %c0_45, %c0_46], %30 {strides = array<i32>} : memref<1x1x8xf32, #tpu.memory_space<vmem>>, vector<1x1x8xf32>,
    return
  }
  func.func @transform_0(%arg0: i32) -> (i32, i32, i32, i32) {
    %c0_i32 = arith.constant 0 : i32
    %c0_i32_0 = arith.constant 0 : i32
    %c0_i32_1 = arith.constant 0 : i32
    %c0_i32_2 = arith.constant 0 : i32
    return %arg0, %c0_i32, %c0_i32_0, %c0_i32_1 : i32, i32, i32, i32
  }
  func.func @transform_1(%arg0: i32) -> (i32, i32) {
    %c0_i32 = arith.constant 0 : i32
    %c0_i32_0 = arith.constant 0 : i32
    %c0_i32_1 = arith.constant 0 : i32
    return %c0_i32, %c0_i32_0 : i32, i32
  }
  func.func @transform_2(%arg0: i32) -> (i32, i32, i32, i32) {
    %c0_i32 = arith.constant 0 : i32
    %c0_i32_0 = arith.constant 0 : i32
    %c0_i32_1 = arith.constant 0 : i32
    %c0_i32_2 = arith.constant 0 : i32
    return %arg0, %c0_i32, %c0_i32_0, %c0_i32_1 : i32, i32, i32, i32
  }
  func.func @transform_3(%arg0: i32) -> (i32, i32, i32) {
    %c0_i32 = arith.constant 0 : i32
    %c0_i32_0 = arith.constant 0 : i32
    %c0_i32_1 = arith.constant 0 : i32
    return %arg0, %c0_i32, %c0_i32_0 : i32, i32, i32
  }
  func.func @transform_4(%arg0: i32) -> (i32, i32, i32) {
    %c0_i32 = arith.constant 0 : i32
    %c0_i32_0 = arith.constant 0 : i32
    %c0_i32_1 = arith.constant 0 : i32
    return %arg0, %c0_i32, %c0_i32_0 : i32, i32, i32
  }
}

</mosaic_0001>

<llo_original>
// kernel: convx_forward.3
$region0: #{convx_forward.3}
  #allocation0 [shape = 'u32[]', space=smem, size = 0x4, offset = 0x4, fixed_abs, tag = 'smem constant byte address 0x4 - core index']
  #allocation1 [shape = 'u32[144,128]{1,0:T(1,128)}', space=vmem, size = 0x12000, scoped, tag = 'internal scratch']
  %s0 = inlined_call_operand.vmem [shape: bf16[2,16,16,8], index: 0, kind: input, shape index: {}]
  %s1 = inlined_call_operand.vmem [shape: f32[1,1,1,8], index: 1, kind: input, shape index: {}]
  %s2 = inlined_call_operand.vmem [shape: f32[1,1,1,8], index: 2, kind: input, shape index: {}]
  %s3 = inlined_call_operand.vmem [shape: f32[2,16,16,8], index: 3, kind: output, shape index: {}]
  %s4 = sld [smem:[#allocation0]]
  $region45: #{convx_forward.3} parent=0
    _
  %s6 = ssub.s32 1, %s4
  %s7 = scalar_select 0, %s6, %s4
  loop: start=0, step=1, limit=4
  $region2: #{convx_forward.3} parent=0 // loop_pre_header
    _
  $region3: #{convx_forward.3} parent=0 // loop_header
    %s9 = sphi 0, %s13
    %p10 = scmp.ge.s32.totalorder %s9, 4
    %s19 = sphi 0, %s21
    %s22 = sphi 0, %s19
    %s23 = sphi 0, %s22
    %s39 = sphi 0, %s23
    %s43 = sphi 0, %s43
    %s45 = sphi 0, %s43
    %s46 = sphi 0, %s45
    %s60 = sphi 0, %s46
    %s64 = sphi 0, %s64
    %s66 = sphi 0, %s64
    %s67 = sphi 0, %s66
    %s81 = sphi 0, %s67
    %s87 = sphi 0, %s89
    %s90 = sphi 0, %s87
    %s91 = sphi 0, %s90
    %s107 = sphi 0, %s91
  $region4: #{convx_forward.3} parent=0 // loop_header_branch
    %12 = sbr.rel (%p10) target = $region8
  $region5: #{convx_forward.3} parent=0 // loop_body
    %s14 = ssub.s32 %s9, 1
    %s15 = ssub.s32 %s9, 2
    %s16 = sadd.s32 %s9, 1
    %s17 = ssub.s32 %s9, %s16
    %p18 = scmp.eq.s32.totalorder %s17, 0
    %s20 = sadd.s32 %s19, 1
    %s21 = scalar_select %p18, %s19, %s20
    %p24 = pneg %p18
    %p25 = scmp.eq.s32.totalorder %s9, 1
    %p26 = por %p24, %p25
    %p27 = scmp.ne.s32.totalorder %s19, %s22
    %p28 = scmp.eq.s32.totalorder %s9, 0
    %p29 = por %p27, %p28
    %p30 = scmp.ne.s32.totalorder %s19, %s22
    %p31 = scmp.eq.s32.totalorder %s14, 1
    %p32 = por %p30, %p31
    %p33 = scmp.ne.s32.totalorder %s22, %s23
    %p34 = scmp.eq.s32.totalorder %s14, 0
    %p35 = por %p33, %p34
    %p36 = scmp.ne.s32.totalorder %s22, %s23
    %p37 = scmp.eq.s32.totalorder %s15, 1
    %p38 = por %p36, %p37
    %p40 = scmp.ne.s32.totalorder %s23, %s39
    %p41 = scmp.eq.s32.totalorder %s15, 0
    %p42 = por %p40, %p41
    %s44 = sadd.s32 %s43, 1
    %p47 = scmp.eq.s32.totalorder %s9, 1
    %p48 = scmp.ne.s32.totalorder %s43, %s45
    %p49 = scmp.eq.s32.totalorder %s9, 0
    %p50 = por %p48, %p49
    %p51 = scmp.ne.s32.totalorder %s43, %s45
    %p52 = scmp.eq.s32.totalorder %s14, 1
    %p53 = por %p51, %p52
    %p54 = scmp.ne.s32.totalorder %s45, %s46
    %p55 = scmp.eq.s32.totalorder %s14, 0
    %p56 = por %p54, %p55
    %p57 = scmp.ne.s32.totalorder %s45, %s46
    %p58 = scmp.eq.s32.totalorder %s15, 1
    %p59 = por %p57, %p58
    %p61 = scmp.ne.s32.totalorder %s46, %s60
    %p62 = scmp.eq.s32.totalorder %s15, 0
    %p63 = por %p61, %p62
    %s65 = sadd.s32 %s64, 1
    %p68 = scmp.eq.s32.totalorder %s9, 1
    %p69 = scmp.ne.s32.totalorder %s64, %s66
    %p70 = scmp.eq.s32.totalorder %s9, 0
    %p71 = por %p69, %p70
    %p72 = scmp.ne.s32.totalorder %s64, %s66
    %p73 = scmp.eq.s32.totalorder %s14, 1
    %p74 = por %p72, %p73
    %p75 = scmp.ne.s32.totalorder %s66, %s67
    %p76 = scmp.eq.s32.totalorder %s14, 0
    %p77 = por %p75, %p76
    %p78 = scmp.ne.s32.totalorder %s66, %s67
    %p79 = scmp.eq.s32.totalorder %s15, 1
    %p80 = por %p78, %p79
    %p82 = scmp.ne.s32.totalorder %s67, %s81
    %p83 = scmp.eq.s32.totalorder %s15, 0
    %p84 = por %p82, %p83
    %s85 = ssub.s32 %s9, %s16
    %p86 = scmp.eq.s32.totalorder %s85, 0
    %s88 = sadd.s32 %s87, 1
    %s89 = scalar_select %p86, %s87, %s88
    %p92 = pneg %p86
    %p93 = scmp.eq.s32.totalorder %s9, 1
    %p94 = por %p92, %p93
    %p95 = scmp.ne.s32.totalorder %s87, %s90
    %p96 = scmp.eq.s32.totalorder %s9, 0
    %p97 = por %p95, %p96
    %p98 = scmp.ne.s32.totalorder %s87, %s90
    %p99 = scmp.eq.s32.totalorder %s14, 1
    %p100 = por %p98, %p99
    %p101 = scmp.ne.s32.totalorder %s90, %s91
    %p102 = scmp.eq.s32.totalorder %s14, 0
    %p103 = por %p101, %p102
    %p104 = scmp.ne.s32.totalorder %s90, %s91
    %p105 = scmp.eq.s32.totalorder %s15, 1
    %p106 = por %p104, %p105
    %p108 = scmp.ne.s32.totalorder %s91, %s107
    %p109 = scmp.eq.s32.totalorder %s15, 0
    %p110 = por %p108, %p109
    %p111 = scmp.le.s32.totalorder 1, %s9
    %p112 = scmp.lt.s32.totalorder %s9, 3
    %p113 = pnand %p111, %p112
    %p114 = pneg %p113
    // Predicated region
    $region9: #{convx_forward.3} parent=5 // pred_check
      _
    $region10: #{convx_forward.3} parent=5 // pred_check_branch
      %116 = sbr.rel (%p113) target = $region12
    $region11: #{convx_forward.3} parent=5 // pred_region
      %s117 = ssub.s32 %s9, 1
      // Predicated region
      $region13: #{convx_forward.3} parent=11 // pred_check
        %p118 = pneg %p56
      $region14: #{convx_forward.3} parent=11 // pred_check_branch
        %120 = sbr.rel (%p118) target = $region16
      $region15: #{convx_forward.3} parent=11 // pred_region
        _
      $region16: #{convx_forward.3} parent=11 // pred_fallthru
        _
      // Predicated region
      $region17: #{convx_forward.3} parent=11 // pred_check
        %p121 = pneg %p77
      $region18: #{convx_forward.3} parent=11 // pred_check_branch
        %123 = sbr.rel (%p121) target = $region20
      $region19: #{convx_forward.3} parent=11 // pred_region
        _
      $region20: #{convx_forward.3} parent=11 // pred_fallthru
        _
    $region12: #{convx_forward.3} parent=5 // pred_fallthru
      _
    %p124 = scmp.lt.s32.totalorder %s9, 2
    // Predicated region
    $region21: #{convx_forward.3} parent=5 // pred_check
      %p125 = pneg %p124
    $region22: #{convx_forward.3} parent=5 // pred_check_branch
      %127 = sbr.rel (%p125) target = $region24
    $region23: #{convx_forward.3} parent=5 // pred_region
      // Predicated region
      $region25: #{convx_forward.3} parent=23 // pred_check
        %p128 = pneg %p29
      $region26: #{convx_forward.3} parent=23 // pred_check_branch
        %130 = sbr.rel (%p128) target = $region28
      $region27: #{convx_forward.3} parent=23 // pred_region
        %p131 = scmp.lt.s32.totalorder %s9, 1
        %s132 = scalar_select %p131, %s9, 1
        %s133 = smul.addr %s132, 32
        %s134 = smul.addr %s133, 4
        %s135 = scalar_lea.vmem %s0, %s134
      $region28: #{convx_forward.3} parent=23 // pred_fallthru
        _
    $region24: #{convx_forward.3} parent=5 // pred_fallthru
      _
    %p136 = scmp.le.s32.totalorder 1, %s9
    %p137 = scmp.lt.s32.totalorder %s9, 3
    %p138 = pnand %p136, %p137
    %p139 = pneg %p138
    // Predicated region
    $region29: #{convx_forward.3} parent=5 // pred_check
      _
    $region30: #{convx_forward.3} parent=5 // pred_check_branch
      %141 = sbr.rel (%p138) target = $region32
    $region31: #{convx_forward.3} parent=5 // pred_region
      %s142 = ssub.s32 %s9, 1
      %p143 = scmp.lt.s32.totalorder %s14, 1
      %s144 = scalar_select %p143, %s14, 1
      %s145 = smul.addr %s144, 32
      %s146 = smul.addr %s145, 4
      %s147 = scalar_lea.vmem %s0, %s146
      %p148 = pneg %p35
      %p149 = pneg %p32
      %p150 = pneg %p56
      %p151 = pneg %p53
      %p152 = pneg %p77
      %p153 = pneg %p74
      %p154 = pneg %p103
      %p155 = pneg %p100
      %p156 = scmp.lt.s32.totalorder %s14, 1
      %s157 = scalar_select %p156, %s14, 1
      %s158 = smul.addr %s157, 32
      %s159 = smul.addr %s158, 8
      %s160 = scalar_lea.vmem %s3, %s159
      %p161 = scmp.lt.s32.totalorder %s14, 1
      %s162 = scalar_select %p161, %s14, 1
      %s163 = smul.addr %s162, 32
      %s164 = smul.addr %s163, 4
      %s165 = scalar_lea.vmem %s0, %s164
      %p166 = scmp.lt.s32.totalorder %s14, 1
      %s167 = scalar_select %p166, %s14, 1
      %s168 = smul.addr %s167, 32
      %s169 = smul.addr %s168, 8
      %s170 = scalar_lea.vmem %s3, %s169
      %v171 = vld [vmem:[%s165] sm:$0xf]
      %v172 = vld [vmem:[%s165 + $0x4] sm:$0xf]
      %v173 = vld [vmem:[%s165 + $0x8] sm:$0xf]
      %v174 = vld [vmem:[%s165 + $0xc] sm:$0xf]
      %v175 = vld [vmem:[%s165 + $0x10] sm:$0xf]
      %v176 = vld [vmem:[%s165 + $0x14] sm:$0xf]
      %v177 = vld [vmem:[%s165 + $0x18] sm:$0xf]
      %v178 = vld [vmem:[%s165 + $0x1c] sm:$0xf]
      %v179 = vld [vmem:[%s165 + $0x20] sm:$0xf]
      %v180 = vld [vmem:[%s165 + $0x24] sm:$0xf]
      %v181 = vld [vmem:[%s165 + $0x28] sm:$0xf]
      %v182 = vld [vmem:[%s165 + $0x2c] sm:$0xf]
      %v183 = vld [vmem:[%s165 + $0x30] sm:$0xf]
      %v184 = vld [vmem:[%s165 + $0x34] sm:$0xf]
      %v185 = vld [vmem:[%s165 + $0x38] sm:$0xf]
      %v186 = vld [vmem:[%s165 + $0x3c] sm:$0xf]
      %v187 = vld [vmem:[%s165 + $0x40] sm:$0xf]
      %v188 = vld [vmem:[%s165 + $0x44] sm:$0xf]
      %v189 = vld [vmem:[%s165 + $0x48] sm:$0xf]
      %v190 = vld [vmem:[%s165 + $0x4c] sm:$0xf]
      %v191 = vld [vmem:[%s165 + $0x50] sm:$0xf]
      %v192 = vld [vmem:[%s165 + $0x54] sm:$0xf]
      %v193 = vld [vmem:[%s165 + $0x58] sm:$0xf]
      %v194 = vld [vmem:[%s165 + $0x5c] sm:$0xf]
      %v195 = vld [vmem:[%s165 + $0x60] sm:$0xf]
      %v196 = vld [vmem:[%s165 + $0x64] sm:$0xf]
      %v197 = vld [vmem:[%s165 + $0x68] sm:$0xf]
      %v198 = vld [vmem:[%s165 + $0x6c] sm:$0xf]
      %v199 = vld [vmem:[%s165 + $0x70] sm:$0xf]
      %v200 = vld [vmem:[%s165 + $0x74] sm:$0xf]
      %v201 = vld [vmem:[%s165 + $0x78] sm:$0xf]
      %v202 = vld [vmem:[%s165 + $0x7c] sm:$0xf]
      %v203 = vunpack.c.l.bf16 %v171
      %v204 = vunpack.c.l.bf16 %v172
      %v205 = vunpack.c.l.bf16 %v173
      %v206 = vunpack.c.l.bf16 %v174
      %v207 = vunpack.c.l.bf16 %v175
      %v208 = vunpack.c.l.bf16 %v176
      %v209 = vunpack.c.l.bf16 %v177
      %v210 = vunpack.c.l.bf16 %v178
      %v211 = vunpack.c.l.bf16 %v179
      %v212 = vunpack.c.l.bf16 %v180
      %v213 = vunpack.c.l.bf16 %v181
      %v214 = vunpack.c.l.bf16 %v182
      %v215 = vunpack.c.l.bf16 %v183
      %v216 = vunpack.c.l.bf16 %v184
      %v217 = vunpack.c.l.bf16 %v185
      %v218 = vunpack.c.l.bf16 %v186
      %v219 = vunpack.c.l.bf16 %v187
      %v220 = vunpack.c.l.bf16 %v188
      %v221 = vunpack.c.l.bf16 %v189
      %v222 = vunpack.c.l.bf16 %v190
      %v223 = vunpack.c.l.bf16 %v191
      %v224 = vunpack.c.l.bf16 %v192
      %v225 = vunpack.c.l.bf16 %v193
      %v226 = vunpack.c.l.bf16 %v194
      %v227 = vunpack.c.l.bf16 %v195
      %v228 = vunpack.c.l.bf16 %v196
      %v229 = vunpack.c.l.bf16 %v197
      %v230 = vunpack.c.l.bf16 %v198
      %v231 = vunpack.c.l.bf16 %v199
      %v232 = vunpack.c.l.bf16 %v200
      %v233 = vunpack.c.l.bf16 %v201
      %v234 = vunpack.c.l.bf16 %v202
      %v235 = vld [vmem:[%s1] sm:$0x1]
      %v237 = vlaneseq
      %v238 = vshrl.u32 %v237, 7
      %v239 = vsub.s32 0, %v238
      %v240 = vrot.slane %v235, %v239
      %v242 = vmul.f32 %v203, %v240
      %v243 = vmul.f32 %v204, %v240
      %v244 = vmul.f32 %v205, %v240
      %v245 = vmul.f32 %v206, %v240
      %v246 = vmul.f32 %v207, %v240
      %v247 = vmul.f32 %v208, %v240
      %v248 = vmul.f32 %v209, %v240
      %v249 = vmul.f32 %v210, %v240
      %v250 = vmul.f32 %v211, %v240
      %v251 = vmul.f32 %v212, %v240
      %v252 = vmul.f32 %v213, %v240
      %v253 = vmul.f32 %v214, %v240
      %v254 = vmul.f32 %v215, %v240
      %v255 = vmul.f32 %v216, %v240
      %v256 = vmul.f32 %v217, %v240
      %v257 = vmul.f32 %v218, %v240
      %v258 = vmul.f32 %v219, %v240
      %v259 = vmul.f32 %v220, %v240
      %v260 = vmul.f32 %v221, %v240
      %v261 = vmul.f32 %v222, %v240
      %v262 = vmul.f32 %v223, %v240
      %v263 = vmul.f32 %v224, %v240
      %v264 = vmul.f32 %v225, %v240
      %v265 = vmul.f32 %v226, %v240
      %v266 = vmul.f32 %v227, %v240
      %v267 = vmul.f32 %v228, %v240
      %v268 = vmul.f32 %v229, %v240
      %v269 = vmul.f32 %v230, %v240
      %v270 = vmul.f32 %v231, %v240
      %v271 = vmul.f32 %v232, %v240
      %v272 = vmul.f32 %v233, %v240
      %v273 = vmul.f32 %v234, %v240
      %v274 = vld [vmem:[%s2] sm:$0x1]
      %v276 = vlaneseq
      %v277 = vshrl.u32 %v276, 7
      %v278 = vsub.s32 0, %v277
      %v279 = vrot.slane %v274, %v278
      %v281 = vadd.f32 %v242, %v279
      %v282 = vadd.f32 %v243, %v279
      %v283 = vadd.f32 %v244, %v279
      %v284 = vadd.f32 %v245, %v279
      %v285 = vadd.f32 %v246, %v279
      %v286 = vadd.f32 %v247, %v279
      %v287 = vadd.f32 %v248, %v279
      %v288 = vadd.f32 %v249, %v279
      %v289 = vadd.f32 %v250, %v279
      %v290 = vadd.f32 %v251, %v279
      %v291 = vadd.f32 %v252, %v279
      %v292 = vadd.f32 %v253, %v279
      %v293 = vadd.f32 %v254, %v279
      %v294 = vadd.f32 %v255, %v279
      %v295 = vadd.f32 %v256, %v279
      %v296 = vadd.f32 %v257, %v279
      %v297 = vadd.f32 %v258, %v279
      %v298 = vadd.f32 %v259, %v279
      %v299 = vadd.f32 %v260, %v279
      %v300 = vadd.f32 %v261, %v279
      %v301 = vadd.f32 %v262, %v279
      %v302 = vadd.f32 %v263, %v279
      %v303 = vadd.f32 %v264, %v279
      %v304 = vadd.f32 %v265, %v279
      %v305 = vadd.f32 %v266, %v279
      %v306 = vadd.f32 %v267, %v279
      %v307 = vadd.f32 %v268, %v279
      %v308 = vadd.f32 %v269, %v279
      %v309 = vadd.f32 %v270, %v279
      %v310 = vadd.f32 %v271, %v279
      %v311 = vadd.f32 %v272, %v279
      %v312 = vadd.f32 %v273, %v279
      %v313 = vmax.f32 %v281, 0.0
      %v314 = vmax.f32 %v282, 0.0
      %v315 = vmax.f32 %v283, 0.0
      %v316 = vmax.f32 %v284, 0.0
      %v317 = vmax.f32 %v285, 0.0
      %v318 = vmax.f32 %v286, 0.0
      %v319 = vmax.f32 %v287, 0.0
      %v320 = vmax.f32 %v288, 0.0
      %v321 = vmax.f32 %v289, 0.0
      %v322 = vmax.f32 %v290, 0.0
      %v323 = vmax.f32 %v291, 0.0
      %v324 = vmax.f32 %v292, 0.0
      %v325 = vmax.f32 %v293, 0.0
      %v326 = vmax.f32 %v294, 0.0
      %v327 = vmax.f32 %v295, 0.0
      %v328 = vmax.f32 %v296, 0.0
      %v329 = vmax.f32 %v297, 0.0
      %v330 = vmax.f32 %v298, 0.0
      %v331 = vmax.f32 %v299, 0.0
      %v332 = vmax.f32 %v300, 0.0
      %v333 = vmax.f32 %v301, 0.0
      %v334 = vmax.f32 %v302, 0.0
      %v335 = vmax.f32 %v303, 0.0
      %v336 = vmax.f32 %v304, 0.0
      %v337 = vmax.f32 %v305, 0.0
      %v338 = vmax.f32 %v306, 0.0
      %v339 = vmax.f32 %v307, 0.0
      %v340 = vmax.f32 %v308, 0.0
      %v341 = vmax.f32 %v309, 0.0
      %v342 = vmax.f32 %v310, 0.0
      %v343 = vmax.f32 %v311, 0.0
      %v344 = vmax.f32 %v312, 0.0
      %vm345 = vcmask 64512
      %346 = vst.msk [vmem:[%s170] sm:$0xff] %vm345, %v313
      %347 = vst.msk [vmem:[%s170 + $0x8] sm:$0xff] %vm345, %v314
      %348 = vst.msk [vmem:[%s170 + $0x10] sm:$0xff] %vm345, %v315
      %349 = vst.msk [vmem:[%s170 + $0x18] sm:$0xff] %vm345, %v316
      %350 = vst.msk [vmem:[%s170 + $0x20] sm:$0xff] %vm345, %v317
      %351 = vst.msk [vmem:[%s170 + $0x28] sm:$0xff] %vm345, %v318
      %352 = vst.msk [vmem:[%s170 + $0x30] sm:$0xff] %vm345, %v319
      %353 = vst.msk [vmem:[%s170 + $0x38] sm:$0xff] %vm345, %v320
      %354 = vst.msk [vmem:[%s170 + $0x40] sm:$0xff] %vm345, %v321
      %355 = vst.msk [vmem:[%s170 + $0x48] sm:$0xff] %vm345, %v322
      %356 = vst.msk [vmem:[%s170 + $0x50] sm:$0xff] %vm345, %v323
      %357 = vst.msk [vmem:[%s170 + $0x58] sm:$0xff] %vm345, %v324
      %358 = vst.msk [vmem:[%s170 + $0x60] sm:$0xff] %vm345, %v325
      %359 = vst.msk [vmem:[%s170 + $0x68] sm:$0xff] %vm345, %v326
      %360 = vst.msk [vmem:[%s170 + $0x70] sm:$0xff] %vm345, %v327
      %361 = vst.msk [vmem:[%s170 + $0x78] sm:$0xff] %vm345, %v328
      %362 = vst.msk [vmem:[%s170 + $0x80] sm:$0xff] %vm345, %v329
      %363 = vst.msk [vmem:[%s170 + $0x88] sm:$0xff] %vm345, %v330
      %364 = vst.msk [vmem:[%s170 + $0x90] sm:$0xff] %vm345, %v331
      %365 = vst.msk [vmem:[%s170 + $0x98] sm:$0xff] %vm345, %v332
      %366 = vst.msk [vmem:[%s170 + $0xa0] sm:$0xff] %vm345, %v333
      %367 = vst.msk [vmem:[%s170 + $0xa8] sm:$0xff] %vm345, %v334
      %368 = vst.msk [vmem:[%s170 + $0xb0] sm:$0xff] %vm345, %v335
      %369 = vst.msk [vmem:[%s170 + $0xb8] sm:$0xff] %vm345, %v336
      %370 = vst.msk [vmem:[%s170 + $0xc0] sm:$0xff] %vm345, %v337
      %371 = vst.msk [vmem:[%s170 + $0xc8] sm:$0xff] %vm345, %v338
      %372 = vst.msk [vmem:[%s170 + $0xd0] sm:$0xff] %vm345, %v339
      %373 = vst.msk [vmem:[%s170 + $0xd8] sm:$0xff] %vm345, %v340
      %374 = vst.msk [vmem:[%s170 + $0xe0] sm:$0xff] %vm345, %v341
      %375 = vst.msk [vmem:[%s170 + $0xe8] sm:$0xff] %vm345, %v342
      %376 = vst.msk [vmem:[%s170 + $0xf0] sm:$0xff] %vm345, %v343
      %377 = vst.msk [vmem:[%s170 + $0xf8] sm:$0xff] %vm345, %v344
      %p378 = scmp.lt.s32.totalorder %s14, 1
      %s379 = scalar_select %p378, %s14, 1
      %s380 = smul.addr %s379, 32
      %s381 = smul.addr %s380, 8
      %s382 = scalar_lea.vmem %s3, %s381
      // Predicated region
      $region33: #{convx_forward.3} parent=31 // pred_check
        %p383 = pneg %p100
      $region34: #{convx_forward.3} parent=31 // pred_check_branch
        %385 = sbr.rel (%p383) target = $region36
      $region35: #{convx_forward.3} parent=31 // pred_region
        _
      $region36: #{convx_forward.3} parent=31 // pred_fallthru
        _
    $region32: #{convx_forward.3} parent=5 // pred_fallthru
      _
    %p386 = scmp.le.s32.totalorder 2, %s9
    // Predicated region
    $region37: #{convx_forward.3} parent=5 // pred_check
      %p387 = pneg %p386
    $region38: #{convx_forward.3} parent=5 // pred_check_branch
      %389 = sbr.rel (%p387) target = $region40
    $region39: #{convx_forward.3} parent=5 // pred_region
      %s390 = ssub.s32 %s9, 2
      // Predicated region
      $region41: #{convx_forward.3} parent=39 // pred_check
        %p391 = pneg %p106
      $region42: #{convx_forward.3} parent=39 // pred_check_branch
        %393 = sbr.rel (%p391) target = $region44
      $region43: #{convx_forward.3} parent=39 // pred_region
        %p394 = scmp.lt.s32.totalorder %s15, 1
        %s395 = scalar_select %p394, %s15, 1
        %s396 = smul.addr %s395, 32
        %s397 = smul.addr %s396, 8
        %s398 = scalar_lea.vmem %s3, %s397
      $region44: #{convx_forward.3} parent=39 // pred_fallthru
        _
    $region40: #{convx_forward.3} parent=5 // pred_fallthru
      _
  $region6: #{convx_forward.3} parent=0 // loop_footer
    %s13 = sadd.s32 1, %s9
  $region7: #{convx_forward.3} parent=0 // loop_footer_branch
    %8 = sbr.rel target = $region3
  $region8: #{convx_forward.3} parent=0 // loop_exit
    _

// kernel: convx_forward.2
$region0: #{convx_forward.2}
  #allocation0 [shape = 'u32[]', space=smem, size = 0x4, offset = 0x4, fixed_abs, tag = 'smem constant byte address 0x4 - core index']
  #allocation1 [shape = 'u32[144,128]{1,0:T(1,128)}', space=vmem, size = 0x12000, scoped, tag = 'internal scratch']
  %s0 = inlined_call_operand.vmem [shape: bf16[2,18,18,4], index: 0, kind: input, shape index: {}]
  %s1 = inlined_call_operand.vmem [shape: bf16[36,8], index: 1, kind: input, shape index: {}]
  %s2 = inlined_call_operand.vmem [shape: bf16[2,16,16,8], index: 2, kind: output, shape index: {0}]
  %s3 = inlined_call_operand.vmem [shape: f32[2,1,8], index: 3, kind: output, shape index: {1}]
  %s4 = inlined_call_operand.vmem [shape: f32[2,1,8], index: 4, kind: output, shape index: {2}]
  %5 = xla_tuple %s2, %s3, %s4
  %s6 = sld [smem:[#allocation0]]
  $region57: #{convx_forward.2} parent=0
    _
  %s8 = ssub.s32 1, %s6
  %s9 = scalar_select 0, %s8, %s6
  loop: start=0, step=1, limit=4
  $region2: #{convx_forward.2} parent=0 // loop_pre_header
    _
  $region3: #{convx_forward.2} parent=0 // loop_header
    %s11 = sphi 0, %s15
    %p12 = scmp.ge.s32.totalorder %s11, 4
    %s21 = sphi 0, %s23
    %s24 = sphi 0, %s21
    %s25 = sphi 0, %s24
    %s41 = sphi 0, %s25
    %s45 = sphi 0, %s45
    %s47 = sphi 0, %s45
    %s48 = sphi 0, %s47
    %s62 = sphi 0, %s48
    %s68 = sphi 0, %s70
    %s71 = sphi 0, %s68
    %s72 = sphi 0, %s71
    %s88 = sphi 0, %s72
    %s94 = sphi 0, %s96
    %s97 = sphi 0, %s94
    %s98 = sphi 0, %s97
    %s114 = sphi 0, %s98
    %s120 = sphi 0, %s122
    %s123 = sphi 0, %s120
    %s124 = sphi 0, %s123
    %s140 = sphi 0, %s124
  $region4: #{convx_forward.2} parent=0 // loop_header_branch
    %14 = sbr.rel (%p12) target = $region8
  $region5: #{convx_forward.2} parent=0 // loop_body
    %s16 = ssub.s32 %s11, 1
    %s17 = ssub.s32 %s11, 2
    %s18 = sadd.s32 %s11, 1
    %s19 = ssub.s32 %s11, %s18
    %p20 = scmp.eq.s32.totalorder %s19, 0
    %s22 = sadd.s32 %s21, 1
    %s23 = scalar_select %p20, %s21, %s22
    %p26 = pneg %p20
    %p27 = scmp.eq.s32.totalorder %s11, 1
    %p28 = por %p26, %p27
    %p29 = scmp.ne.s32.totalorder %s21, %s24
    %p30 = scmp.eq.s32.totalorder %s11, 0
    %p31 = por %p29, %p30
    %p32 = scmp.ne.s32.totalorder %s21, %s24
    %p33 = scmp.eq.s32.totalorder %s16, 1
    %p34 = por %p32, %p33
    %p35 = scmp.ne.s32.totalorder %s24, %s25
    %p36 = scmp.eq.s32.totalorder %s16, 0
    %p37 = por %p35, %p36
    %p38 = scmp.ne.s32.totalorder %s24, %s25
    %p39 = scmp.eq.s32.totalorder %s17, 1
    %p40 = por %p38, %p39
    %p42 = scmp.ne.s32.totalorder %s25, %s41
    %p43 = scmp.eq.s32.totalorder %s17, 0
    %p44 = por %p42, %p43
    %s46 = sadd.s32 %s45, 1
    %p49 = scmp.eq.s32.totalorder %s11, 1
    %p50 = scmp.ne.s32.totalorder %s45, %s47
    %p51 = scmp.eq.s32.totalorder %s11, 0
    %p52 = por %p50, %p51
    %p53 = scmp.ne.s32.totalorder %s45, %s47
    %p54 = scmp.eq.s32.totalorder %s16, 1
    %p55 = por %p53, %p54
    %p56 = scmp.ne.s32.totalorder %s47, %s48
    %p57 = scmp.eq.s32.totalorder %s16, 0
    %p58 = por %p56, %p57
    %p59 = scmp.ne.s32.totalorder %s47, %s48
    %p60 = scmp.eq.s32.totalorder %s17, 1
    %p61 = por %p59, %p60
    %p63 = scmp.ne.s32.totalorder %s48, %s62
    %p64 = scmp.eq.s32.totalorder %s17, 0
    %p65 = por %p63, %p64
    %s66 = ssub.s32 %s11, %s18
    %p67 = scmp.eq.s32.totalorder %s66, 0
    %s69 = sadd.s32 %s68, 1
    %s70 = scalar_select %p67, %s68, %s69
    %p73 = pneg %p67
    %p74 = scmp.eq.s32.totalorder %s11, 1
    %p75 = por %p73, %p74
    %p76 = scmp.ne.s32.totalorder %s68, %s71
    %p77 = scmp.eq.s32.totalorder %s11, 0
    %p78 = por %p76, %p77
    %p79 = scmp.ne.s32.totalorder %s68, %s71
    %p80 = scmp.eq.s32.totalorder %s16, 1
    %p81 = por %p79, %p80
    %p82 = scmp.ne.s32.totalorder %s71, %s72
    %p83 = scmp.eq.s32.totalorder %s16, 0
    %p84 = por %p82, %p83
    %p85 = scmp.ne.s32.totalorder %s71, %s72
    %p86 = scmp.eq.s32.totalorder %s17, 1
    %p87 = por %p85, %p86
    %p89 = scmp.ne.s32.totalorder %s72, %s88
    %p90 = scmp.eq.s32.totalorder %s17, 0
    %p91 = por %p89, %p90
    %s92 = ssub.s32 %s11, %s18
    %p93 = scmp.eq.s32.totalorder %s92, 0
    %s95 = sadd.s32 %s94, 1
    %s96 = scalar_select %p93, %s94, %s95
    %p99 = pneg %p93
    %p100 = scmp.eq.s32.totalorder %s11, 1
    %p101 = por %p99, %p100
    %p102 = scmp.ne.s32.totalorder %s94, %s97
    %p103 = scmp.eq.s32.totalorder %s11, 0
    %p104 = por %p102, %p103
    %p105 = scmp.ne.s32.totalorder %s94, %s97
    %p106 = scmp.eq.s32.totalorder %s16, 1
    %p107 = por %p105, %p106
    %p108 = scmp.ne.s32.totalorder %s97, %s98
    %p109 = scmp.eq.s32.totalorder %s16, 0
    %p110 = por %p108, %p109
    %p111 = scmp.ne.s32.totalorder %s97, %s98
    %p112 = scmp.eq.s32.totalorder %s17, 1
    %p113 = por %p111, %p112
    %p115 = scmp.ne.s32.totalorder %s98, %s114
    %p116 = scmp.eq.s32.totalorder %s17, 0
    %p117 = por %p115, %p116
    %s118 = ssub.s32 %s11, %s18
    %p119 = scmp.eq.s32.totalorder %s118, 0
    %s121 = sadd.s32 %s120, 1
    %s122 = scalar_select %p119, %s120, %s121
    %p125 = pneg %p119
    %p126 = scmp.eq.s32.totalorder %s11, 1
    %p127 = por %p125, %p126
    %p128 = scmp.ne.s32.totalorder %s120, %s123
    %p129 = scmp.eq.s32.totalorder %s11, 0
    %p130 = por %p128, %p129
    %p131 = scmp.ne.s32.totalorder %s120, %s123
    %p132 = scmp.eq.s32.totalorder %s16, 1
    %p133 = por %p131, %p132
    %p134 = scmp.ne.s32.totalorder %s123, %s124
    %p135 = scmp.eq.s32.totalorder %s16, 0
    %p136 = por %p134, %p135
    %p137 = scmp.ne.s32.totalorder %s123, %s124
    %p138 = scmp.eq.s32.totalorder %s17, 1
    %p139 = por %p137, %p138
    %p141 = scmp.ne.s32.totalorder %s124, %s140
    %p142 = scmp.eq.s32.totalorder %s17, 0
    %p143 = por %p141, %p142
    %p144 = scmp.le.s32.totalorder 1, %s11
    %p145 = scmp.lt.s32.totalorder %s11, 3
    %p146 = pnand %p144, %p145
    %p147 = pneg %p146
    // Predicated region
    $region9: #{convx_forward.2} parent=5 // pred_check
      _
    $region10: #{convx_forward.2} parent=5 // pred_check_branch
      %149 = sbr.rel (%p146) target = $region12
    $region11: #{convx_forward.2} parent=5 // pred_region
      %s150 = ssub.s32 %s11, 1
      // Predicated region
      $region13: #{convx_forward.2} parent=11 // pred_check
        %p151 = pneg %p58
      $region14: #{convx_forward.2} parent=11 // pred_check_branch
        %153 = sbr.rel (%p151) target = $region16
      $region15: #{convx_forward.2} parent=11 // pred_region
        _
      $region16: #{convx_forward.2} parent=11 // pred_fallthru
        _
    $region12: #{convx_forward.2} parent=5 // pred_fallthru
      _
    %p154 = scmp.lt.s32.totalorder %s11, 2
    // Predicated region
    $region17: #{convx_forward.2} parent=5 // pred_check
      %p155 = pneg %p154
    $region18: #{convx_forward.2} parent=5 // pred_check_branch
      %157 = sbr.rel (%p155) target = $region20
    $region19: #{convx_forward.2} parent=5 // pred_region
      // Predicated region
      $region21: #{convx_forward.2} parent=19 // pred_check
        %p158 = pneg %p31
      $region22: #{convx_forward.2} parent=19 // pred_check_branch
        %160 = sbr.rel (%p158) target = $region24
      $region23: #{convx_forward.2} parent=19 // pred_region
        %p161 = scmp.lt.s32.totalorder %s11, 1
        %s162 = scalar_select %p161, %s11, 1
        %s163 = smul.addr %s162, 54
        %s164 = smul.addr %s163, 4
        %s165 = scalar_lea.vmem %s0, %s164
      $region24: #{convx_forward.2} parent=19 // pred_fallthru
        _
    $region20: #{convx_forward.2} parent=5 // pred_fallthru
      _
    %p166 = scmp.le.s32.totalorder 1, %s11
    %p167 = scmp.lt.s32.totalorder %s11, 3
    %p168 = pnand %p166, %p167
    %p169 = pneg %p168
    // Predicated region
    $region25: #{convx_forward.2} parent=5 // pred_check
      _
    $region26: #{convx_forward.2} parent=5 // pred_check_branch
      %171 = sbr.rel (%p168) target = $region28
    $region27: #{convx_forward.2} parent=5 // pred_region
      %s172 = ssub.s32 %s11, 1
      %p173 = scmp.lt.s32.totalorder %s16, 1
      %s174 = scalar_select %p173, %s16, 1
      %s175 = smul.addr %s174, 54
      %s176 = smul.addr %s175, 4
      %s177 = scalar_lea.vmem %s0, %s176
      %p178 = pneg %p37
      %p179 = pneg %p34
      %p180 = pneg %p58
      %p181 = pneg %p55
      %p182 = pneg %p84
      %p183 = pneg %p81
      %p184 = scmp.lt.s32.totalorder %s16, 1
      %s185 = scalar_select %p184, %s16, 1
      %s186 = smul.addr %s185, 32
      %s187 = smul.addr %s186, 4
      %s188 = scalar_lea.vmem %s2, %s187
      %p189 = pneg %p110
      %p190 = pneg %p107
      %p191 = scmp.lt.s32.totalorder %s16, 1
      %s192 = scalar_select %p191, %s16, 1
      %s193 = scalar_lea.vmem %s3, %s192
      %p194 = pneg %p136
      %p195 = pneg %p133
      %p196 = scmp.lt.s32.totalorder %s16, 1
      %s197 = scalar_select %p196, %s16, 1
      %s198 = scalar_lea.vmem %s4, %s197
      %p199 = scmp.lt.s32.totalorder %s16, 1
      %s200 = scalar_select %p199, %s16, 1
      %s201 = smul.addr %s200, 54
      %s202 = smul.addr %s201, 4
      %s203 = scalar_lea.vmem %s0, %s202
      %p204 = scmp.lt.s32.totalorder %s16, 1
      %s205 = scalar_select %p204, %s16, 1
      %s206 = smul.addr %s205, 32
      %s207 = smul.addr %s206, 4
      %s208 = scalar_lea.vmem %s2, %s207
      %p209 = scmp.lt.s32.totalorder %s16, 1
      %s210 = scalar_select %p209, %s16, 1
      %s211 = scalar_lea.vmem %s3, %s210
      %p212 = scmp.lt.s32.totalorder %s16, 1
      %s213 = scalar_select %p212, %s16, 1
      %s214 = scalar_lea.vmem %s4, %s213
      %v216 = vld [vmem:[%s203] sm:$0xf]
      %v217 = vld [vmem:[%s203 + $0x4] sm:$0xf]
      %v218 = vld [vmem:[%s203 + $0xc] sm:$0xf]
      %v219 = vld [vmem:[%s203 + $0x10] sm:$0xf]
      %v220 = vld [vmem:[%s203 + $0x18] sm:$0xf]
      %v221 = vld [vmem:[%s203 + $0x1c] sm:$0xf]
      %v222 = vld [vmem:[%s203 + $0x24] sm:$0xf]
      %v223 = vld [vmem:[%s203 + $0x28] sm:$0xf]
      %v224 = vld [vmem:[%s203 + $0x30] sm:$0xf]
      %v225 = vld [vmem:[%s203 + $0x34] sm:$0xf]
      %v226 = vld [vmem:[%s203 + $0x3c] sm:$0xf]
      %v227 = vld [vmem:[%s203 + $0x40] sm:$0xf]
      %v228 = vld [vmem:[%s203 + $0x48] sm:$0xf]
      %v229 = vld [vmem:[%s203 + $0x4c] sm:$0xf]
      %v230 = vld [vmem:[%s203 + $0x54] sm:$0xf]
      %v231 = vld [vmem:[%s203 + $0x58] sm:$0xf]
      %v232 = vld [vmem:[%s203 + $0x60] sm:$0xf]
      %v233 = vld [vmem:[%s203 + $0x64] sm:$0xf]
      %v234 = vld [vmem:[%s203 + $0x6c] sm:$0xf]
      %v235 = vld [vmem:[%s203 + $0x70] sm:$0xf]
      %v236 = vld [vmem:[%s203 + $0x78] sm:$0xf]
      %v237 = vld [vmem:[%s203 + $0x7c] sm:$0xf]
      %v238 = vld [vmem:[%s203 + $0x84] sm:$0xf]
      %v239 = vld [vmem:[%s203 + $0x88] sm:$0xf]
      %v240 = vld [vmem:[%s203 + $0x90] sm:$0xf]
      %v241 = vld [vmem:[%s203 + $0x94] sm:$0xf]
      %v242 = vld [vmem:[%s203 + $0x9c] sm:$0xf]
      %v243 = vld [vmem:[%s203 + $0xa0] sm:$0xf]
      %v244 = vld [vmem:[%s203 + $0xa8] sm:$0xf]
      %v245 = vld [vmem:[%s203 + $0xac] sm:$0xf]
      %v246 = vld [vmem:[%s203 + $0xb4] sm:$0xf]
      %v247 = vld [vmem:[%s203 + $0xb8] sm:$0xf]
      %v248 = vld [vmem:[%s203 + $0x8] sm:$0x1]
      %v249 = vld [vmem:[%s203 + $0x14] sm:$0x1]
      %v250 = vld [vmem:[%s203 + $0x20] sm:$0x1]
      %v251 = vld [vmem:[%s203 + $0x2c] sm:$0x1]
      %v252 = vld [vmem:[%s203 + $0x38] sm:$0x1]
      %v253 = vld [vmem:[%s203 + $0x44] sm:$0x1]
      %v254 = vld [vmem:[%s203 + $0x50] sm:$0x1]
      %v255 = vld [vmem:[%s203 + $0x5c] sm:$0x1]
      %v256 = vld [vmem:[%s203 + $0x68] sm:$0x1]
      %v257 = vld [vmem:[%s203 + $0x74] sm:$0x1]
      %v258 = vld [vmem:[%s203 + $0x80] sm:$0x1]
      %v259 = vld [vmem:[%s203 + $0x8c] sm:$0x1]
      %v260 = vld [vmem:[%s203 + $0x98] sm:$0x1]
      %v261 = vld [vmem:[%s203 + $0xa4] sm:$0x1]
      %v262 = vld [vmem:[%s203 + $0xb0] sm:$0x1]
      %v263 = vld [vmem:[%s203 + $0xbc] sm:$0x1]
      %v264 = vld [vmem:[%s203] sm:$0xe]
      %v265 = vld [vmem:[%s203 + $0xc] sm:$0xe]
      %v266 = vld [vmem:[%s203 + $0x18] sm:$0xe]
      %v267 = vld [vmem:[%s203 + $0x24] sm:$0xe]
      %v268 = vld [vmem:[%s203 + $0x30] sm:$0xe]
      %v269 = vld [vmem:[%s203 + $0x3c] sm:$0xe]
      %v270 = vld [vmem:[%s203 + $0x48] sm:$0xe]
      %v271 = vld [vmem:[%s203 + $0x54] sm:$0xe]
      %v272 = vld [vmem:[%s203 + $0x60] sm:$0xe]
      %v273 = vld [vmem:[%s203 + $0x6c] sm:$0xe]
      %v274 = vld [vmem:[%s203 + $0x78] sm:$0xe]
      %v275 = vld [vmem:[%s203 + $0x84] sm:$0xe]
      %v276 = vld [vmem:[%s203 + $0x90] sm:$0xe]
      %v277 = vld [vmem:[%s203 + $0x9c] sm:$0xe]
      %v278 = vld [vmem:[%s203 + $0xa8] sm:$0xe]
      %v279 = vld [vmem:[%s203 + $0xb4] sm:$0xe]
      %s280 = scalar_lea.vmem %s203, 12
      %v281 = vld [vmem:[%s280] sm:$0xf]
      %v282 = vld [vmem:[%s280 + $0x4] sm:$0xf]
      %v283 = vld [vmem:[%s280 + $0xc] sm:$0xf]
      %v284 = vld [vmem:[%s280 + $0x10] sm:$0xf]
      %v285 = vld [vmem:[%s280 + $0x18] sm:$0xf]
      %v286 = vld [vmem:[%s280 + $0x1c] sm:$0xf]
      %v287 = vld [vmem:[%s280 + $0x24] sm:$0xf]
      %v288 = vld [vmem:[%s280 + $0x28] sm:$0xf]
      %v289 = vld [vmem:[%s280 + $0x30] sm:$0xf]
      %v290 = vld [vmem:[%s280 + $0x34] sm:$0xf]
      %v291 = vld [vmem:[%s280 + $0x3c] sm:$0xf]
      %v292 = vld [vmem:[%s280 + $0x40] sm:$0xf]
      %v293 = vld [vmem:[%s280 + $0x48] sm:$0xf]
      %v294 = vld [vmem:[%s280 + $0x4c] sm:$0xf]
      %v295 = vld [vmem:[%s280 + $0x54] sm:$0xf]
      %v296 = vld [vmem:[%s280 + $0x58] sm:$0xf]
      %v297 = vld [vmem:[%s280 + $0x60] sm:$0xf]
      %v298 = vld [vmem:[%s280 + $0x64] sm:$0xf]
      %v299 = vld [vmem:[%s280 + $0x6c] sm:$0xf]
      %v300 = vld [vmem:[%s280 + $0x70] sm:$0xf]
      %v301 = vld [vmem:[%s280 + $0x78] sm:$0xf]
      %v302 = vld [vmem:[%s280 + $0x7c] sm:$0xf]
      %v303 = vld [vmem:[%s280 + $0x84] sm:$0xf]
      %v304 = vld [vmem:[%s280 + $0x88] sm:$0xf]
      %v305 = vld [vmem:[%s280 + $0x90] sm:$0xf]
      %v306 = vld [vmem:[%s280 + $0x94] sm:$0xf]
      %v307 = vld [vmem:[%s280 + $0x9c] sm:$0xf]
      %v308 = vld [vmem:[%s280 + $0xa0] sm:$0xf]
      %v309 = vld [vmem:[%s280 + $0xa8] sm:$0xf]
      %v310 = vld [vmem:[%s280 + $0xac] sm:$0xf]
      %v311 = vld [vmem:[%s280 + $0xb4] sm:$0xf]
      %v312 = vld [vmem:[%s280 + $0xb8] sm:$0xf]
      %v313 = vld [vmem:[%s280 + $0x8] sm:$0x1]
      %v314 = vld [vmem:[%s280 + $0x14] sm:$0x1]
      %v315 = vld [vmem:[%s280 + $0x20] sm:$0x1]
      %v316 = vld [vmem:[%s280 + $0x2c] sm:$0x1]
      %v317 = vld [vmem:[%s280 + $0x38] sm:$0x1]
      %v318 = vld [vmem:[%s280 + $0x44] sm:$0x1]
      %v319 = vld [vmem:[%s280 + $0x50] sm:$0x1]
      %v320 = vld [vmem:[%s280 + $0x5c] sm:$0x1]
      %v321 = vld [vmem:[%s280 + $0x68] sm:$0x1]
      %v322 = vld [vmem:[%s280 + $0x74] sm:$0x1]
      %v323 = vld [vmem:[%s280 + $0x80] sm:$0x1]
      %v324 = vld [vmem:[%s280 + $0x8c] sm:$0x1]
      %v325 = vld [vmem:[%s280 + $0x98] sm:$0x1]
      %v326 = vld [vmem:[%s280 + $0xa4] sm:$0x1]
      %v327 = vld [vmem:[%s280 + $0xb0] sm:$0x1]
      %v328 = vld [vmem:[%s280 + $0xbc] sm:$0x1]
      %v329 = vld [vmem:[%s280] sm:$0xe]
      %v330 = vld [vmem:[%s280 + $0xc] sm:$0xe]
      %v331 = vld [vmem:[%s280 + $0x18] sm:$0xe]
      %v332 = vld [vmem:[%s280 + $0x24] sm:$0xe]
      %v333 = vld [vmem:[%s280 + $0x30] sm:$0xe]
      %v334 = vld [vmem:[%s280 + $0x3c] sm:$0xe]
      %v335 = vld [vmem:[%s280 + $0x48] sm:$0xe]
      %v336 = vld [vmem:[%s280 + $0x54] sm:$0xe]
      %v337 = vld [vmem:[%s280 + $0x60] sm:$0xe]
      %v338 = vld [vmem:[%s280 + $0x6c] sm:$0xe]
      %v339 = vld [vmem:[%s280 + $0x78] sm:$0xe]
      %v340 = vld [vmem:[%s280 + $0x84] sm:$0xe]
      %v341 = vld [vmem:[%s280 + $0x90] sm:$0xe]
      %v342 = vld [vmem:[%s280 + $0x9c] sm:$0xe]
      %v343 = vld [vmem:[%s280 + $0xa8] sm:$0xe]
      %v344 = vld [vmem:[%s280 + $0xb4] sm:$0xe]
      %s345 = scalar_lea.vmem %s203, 24
      %v346 = vld [vmem:[%s345] sm:$0xf]
      %v347 = vld [vmem:[%s345 + $0x4] sm:$0xf]
      %v348 = vld [vmem:[%s345 + $0xc] sm:$0xf]
      %v349 = vld [vmem:[%s345 + $0x10] sm:$0xf]
      %v350 = vld [vmem:[%s345 + $0x18] sm:$0xf]
      %v351 = vld [vmem:[%s345 + $0x1c] sm:$0xf]
      %v352 = vld [vmem:[%s345 + $0x24] sm:$0xf]
      %v353 = vld [vmem:[%s345 + $0x28] sm:$0xf]
      %v354 = vld [vmem:[%s345 + $0x30] sm:$0xf]
      %v355 = vld [vmem:[%s345 + $0x34] sm:$0xf]
      %v356 = vld [vmem:[%s345 + $0x3c] sm:$0xf]
      %v357 = vld [vmem:[%s345 + $0x40] sm:$0xf]
      %v358 = vld [vmem:[%s345 + $0x48] sm:$0xf]
      %v359 = vld [vmem:[%s345 + $0x4c] sm:$0xf]
      %v360 = vld [vmem:[%s345 + $0x54] sm:$0xf]
      %v361 = vld [vmem:[%s345 + $0x58] sm:$0xf]
      %v362 = vld [vmem:[%s345 + $0x60] sm:$0xf]
      %v363 = vld [vmem:[%s345 + $0x64] sm:$0xf]
      %v364 = vld [vmem:[%s345 + $0x6c] sm:$0xf]
      %v365 = vld [vmem:[%s345 + $0x70] sm:$0xf]
      %v366 = vld [vmem:[%s345 + $0x78] sm:$0xf]
      %v367 = vld [vmem:[%s345 + $0x7c] sm:$0xf]
      %v368 = vld [vmem:[%s345 + $0x84] sm:$0xf]
      %v369 = vld [vmem:[%s345 + $0x88] sm:$0xf]
      %v370 = vld [vmem:[%s345 + $0x90] sm:$0xf]
      %v371 = vld [vmem:[%s345 + $0x94] sm:$0xf]
      %v372 = vld [vmem:[%s345 + $0x9c] sm:$0xf]
      %v373 = vld [vmem:[%s345 + $0xa0] sm:$0xf]
      %v374 = vld [vmem:[%s345 + $0xa8] sm:$0xf]
      %v375 = vld [vmem:[%s345 + $0xac] sm:$0xf]
      %v376 = vld [vmem:[%s345 + $0xb4] sm:$0xf]
      %v377 = vld [vmem:[%s345 + $0xb8] sm:$0xf]
      %v378 = vld [vmem:[%s345 + $0x8] sm:$0x1]
      %v379 = vld [vmem:[%s345 + $0x14] sm:$0x1]
      %v380 = vld [vmem:[%s345 + $0x20] sm:$0x1]
      %v381 = vld [vmem:[%s345 + $0x2c] sm:$0x1]
      %v382 = vld [vmem:[%s345 + $0x38] sm:$0x1]
      %v383 = vld [vmem:[%s345 + $0x44] sm:$0x1]
      %v384 = vld [vmem:[%s345 + $0x50] sm:$0x1]
      %v385 = vld [vmem:[%s345 + $0x5c] sm:$0x1]
      %v386 = vld [vmem:[%s345 + $0x68] sm:$0x1]
      %v387 = vld [vmem:[%s345 + $0x74] sm:$0x1]
      %v388 = vld [vmem:[%s345 + $0x80] sm:$0x1]
      %v389 = vld [vmem:[%s345 + $0x8c] sm:$0x1]
      %v390 = vld [vmem:[%s345 + $0x98] sm:$0x1]
      %v391 = vld [vmem:[%s345 + $0xa4] sm:$0x1]
      %v392 = vld [vmem:[%s345 + $0xb0] sm:$0x1]
      %v393 = vld [vmem:[%s345 + $0xbc] sm:$0x1]
      %v394 = vld [vmem:[%s345] sm:$0xe]
      %v395 = vld [vmem:[%s345 + $0xc] sm:$0xe]
      %v396 = vld [vmem:[%s345 + $0x18] sm:$0xe]
      %v397 = vld [vmem:[%s345 + $0x24] sm:$0xe]
      %v398 = vld [vmem:[%s345 + $0x30] sm:$0xe]
      %v399 = vld [vmem:[%s345 + $0x3c] sm:$0xe]
      %v400 = vld [vmem:[%s345 + $0x48] sm:$0xe]
      %v401 = vld [vmem:[%s345 + $0x54] sm:$0xe]
      %v402 = vld [vmem:[%s345 + $0x60] sm:$0xe]
      %v403 = vld [vmem:[%s345 + $0x6c] sm:$0xe]
      %v404 = vld [vmem:[%s345 + $0x78] sm:$0xe]
      %v405 = vld [vmem:[%s345 + $0x84] sm:$0xe]
      %v406 = vld [vmem:[%s345 + $0x90] sm:$0xe]
      %v407 = vld [vmem:[%s345 + $0x9c] sm:$0xe]
      %v408 = vld [vmem:[%s345 + $0xa8] sm:$0xe]
      %v409 = vld [vmem:[%s345 + $0xb4] sm:$0xe]
      %v442 = vunpack.c.l.b16 %v216
      %v443 = vunpack.c.l.b16 %v217
      %v444 = vunpack.c.l.b16 %v218
      %v445 = vunpack.c.l.b16 %v219
      %v446 = vunpack.c.l.b16 %v220
      %v447 = vunpack.c.l.b16 %v221
      %v448 = vunpack.c.l.b16 %v222
      %v449 = vunpack.c.l.b16 %v223
      %v450 = vunpack.c.l.b16 %v224
      %v451 = vunpack.c.l.b16 %v225
      %v452 = vunpack.c.l.b16 %v226
      %v453 = vunpack.c.l.b16 %v227
      %v454 = vunpack.c.l.b16 %v228
      %v455 = vunpack.c.l.b16 %v229
      %v456 = vunpack.c.l.b16 %v230
      %v457 = vunpack.c.l.b16 %v231
      %v458 = vunpack.c.l.b16 %v232
      %v459 = vunpack.c.l.b16 %v233
      %v460 = vunpack.c.l.b16 %v234
      %v461 = vunpack.c.l.b16 %v235
      %v462 = vunpack.c.l.b16 %v236
      %v463 = vunpack.c.l.b16 %v237
      %v464 = vunpack.c.l.b16 %v238
      %v465 = vunpack.c.l.b16 %v239
      %v466 = vunpack.c.l.b16 %v240
      %v467 = vunpack.c.l.b16 %v241
      %v468 = vunpack.c.l.b16 %v242
      %v469 = vunpack.c.l.b16 %v243
      %v470 = vunpack.c.l.b16 %v244
      %v471 = vunpack.c.l.b16 %v245
      %v472 = vunpack.c.l.b16 %v246
      %v473 = vunpack.c.l.b16 %v247
      %v474 = vpack.c.b16 %v443, %v442
      %v475 = vpack.c.b16 %v445, %v444
      %v476 = vpack.c.b16 %v447, %v446
      %v477 = vpack.c.b16 %v449, %v448
      %v478 = vpack.c.b16 %v451, %v450
      %v479 = vpack.c.b16 %v453, %v452
      %v480 = vpack.c.b16 %v455, %v454
      %v481 = vpack.c.b16 %v457, %v456
      %v482 = vpack.c.b16 %v459, %v458
      %v483 = vpack.c.b16 %v461, %v460
      %v484 = vpack.c.b16 %v463, %v462
      %v485 = vpack.c.b16 %v465, %v464
      %v486 = vpack.c.b16 %v467, %v466
      %v487 = vpack.c.b16 %v469, %v468
      %v488 = vpack.c.b16 %v471, %v470
      %v489 = vpack.c.b16 %v473, %v472
      %v506 = vunpack.c.l.b16 %v248
      %v507 = vunpack.c.l.b16 %v249
      %v508 = vunpack.c.l.b16 %v250
      %v509 = vunpack.c.l.b16 %v251
      %v510 = vunpack.c.l.b16 %v252
      %v511 = vunpack.c.l.b16 %v253
      %v512 = vunpack.c.l.b16 %v254
      %v513 = vunpack.c.l.b16 %v255
      %v514 = vunpack.c.l.b16 %v256
      %v515 = vunpack.c.l.b16 %v257
      %v516 = vunpack.c.l.b16 %v258
      %v517 = vunpack.c.l.b16 %v259
      %v518 = vunpack.c.l.b16 %v260
      %v519 = vunpack.c.l.b16 %v261
      %v520 = vunpack.c.l.b16 %v262
      %v521 = vunpack.c.l.b16 %v263
      %v522 = vpack.c.b16 %v506, %v506
      %v523 = vpack.c.b16 %v507, %v507
      %v524 = vpack.c.b16 %v508, %v508
      %v525 = vpack.c.b16 %v509, %v509
      %v526 = vpack.c.b16 %v510, %v510
      %v527 = vpack.c.b16 %v511, %v511
      %v528 = vpack.c.b16 %v512, %v512
      %v529 = vpack.c.b16 %v513, %v513
      %v530 = vpack.c.b16 %v514, %v514
      %v531 = vpack.c.b16 %v515, %v515
      %v532 = vpack.c.b16 %v516, %v516
      %v533 = vpack.c.b16 %v517, %v517
      %v534 = vpack.c.b16 %v518, %v518
      %v535 = vpack.c.b16 %v519, %v519
      %v536 = vpack.c.b16 %v520, %v520
      %v537 = vpack.c.b16 %v521, %v521
      %vm538 = vsmask.f32 7424
      %v540 = vshrl.u32 %v474, 16
      %v542 = vshll.u32 %v474, 16
      %v544 = vrot.slane %v542, 1
      %v545 = vor.u32 %v540, %v544
      %v547 = vshll.u32 %v522, 16
      %v549 = vrot.slane %v547, 1
      %v550 = vsel %vm538, %v545, %v549
      %v552 = vshrl.u32 %v475, 16
      %v554 = vshll.u32 %v475, 16
      %v556 = vrot.slane %v554, 1
      %v557 = vor.u32 %v552, %v556
      %v559 = vshll.u32 %v523, 16
      %v561 = vrot.slane %v559, 1
      %v562 = vsel %vm538, %v557, %v561
      %v564 = vshrl.u32 %v476, 16
      %v566 = vshll.u32 %v476, 16
      %v568 = vrot.slane %v566, 1
      %v569 = vor.u32 %v564, %v568
      %v571 = vshll.u32 %v524, 16
      %v573 = vrot.slane %v571, 1
      %v574 = vsel %vm538, %v569, %v573
      %v576 = vshrl.u32 %v477, 16
      %v578 = vshll.u32 %v477, 16
      %v580 = vrot.slane %v578, 1
      %v581 = vor.u32 %v576, %v580
      %v583 = vshll.u32 %v525, 16
      %v585 = vrot.slane %v583, 1
      %v586 = vsel %vm538, %v581, %v585
      %v588 = vshrl.u32 %v478, 16
      %v590 = vshll.u32 %v478, 16
      %v592 = vrot.slane %v590, 1
      %v593 = vor.u32 %v588, %v592
      %v595 = vshll.u32 %v526, 16
      %v597 = vrot.slane %v595, 1
      %v598 = vsel %vm538, %v593, %v597
      %v600 = vshrl.u32 %v479, 16
      %v602 = vshll.u32 %v479, 16
      %v604 = vrot.slane %v602, 1
      %v605 = vor.u32 %v600, %v604
      %v607 = vshll.u32 %v527, 16
      %v609 = vrot.slane %v607, 1
      %v610 = vsel %vm538, %v605, %v609
      %v612 = vshrl.u32 %v480, 16
      %v614 = vshll.u32 %v480, 16
      %v616 = vrot.slane %v614, 1
      %v617 = vor.u32 %v612, %v616
      %v619 = vshll.u32 %v528, 16
      %v621 = vrot.slane %v619, 1
      %v622 = vsel %vm538, %v617, %v621
      %v624 = vshrl.u32 %v481, 16
      %v626 = vshll.u32 %v481, 16
      %v628 = vrot.slane %v626, 1
      %v629 = vor.u32 %v624, %v628
      %v631 = vshll.u32 %v529, 16
      %v633 = vrot.slane %v631, 1
      %v634 = vsel %vm538, %v629, %v633
      %v636 = vshrl.u32 %v482, 16
      %v638 = vshll.u32 %v482, 16
      %v640 = vrot.slane %v638, 1
      %v641 = vor.u32 %v636, %v640
      %v643 = vshll.u32 %v530, 16
      %v645 = vrot.slane %v643, 1
      %v646 = vsel %vm538, %v641, %v645
      %v648 = vshrl.u32 %v483, 16
      %v650 = vshll.u32 %v483, 16
      %v652 = vrot.slane %v650, 1
      %v653 = vor.u32 %v648, %v652
      %v655 = vshll.u32 %v531, 16
      %v657 = vrot.slane %v655, 1
      %v658 = vsel %vm538, %v653, %v657
      %v660 = vshrl.u32 %v484, 16
      %v662 = vshll.u32 %v484, 16
      %v664 = vrot.slane %v662, 1
      %v665 = vor.u32 %v660, %v664
      %v667 = vshll.u32 %v532, 16
      %v669 = vrot.slane %v667, 1
      %v670 = vsel %vm538, %v665, %v669
      %v672 = vshrl.u32 %v485, 16
      %v674 = vshll.u32 %v485, 16
      %v676 = vrot.slane %v674, 1
      %v677 = vor.u32 %v672, %v676
      %v679 = vshll.u32 %v533, 16
      %v681 = vrot.slane %v679, 1
      %v682 = vsel %vm538, %v677, %v681
      %v684 = vshrl.u32 %v486, 16
      %v686 = vshll.u32 %v486, 16
      %v688 = vrot.slane %v686, 1
      %v689 = vor.u32 %v684, %v688
      %v691 = vshll.u32 %v534, 16
      %v693 = vrot.slane %v691, 1
      %v694 = vsel %vm538, %v689, %v693
      %v696 = vshrl.u32 %v487, 16
      %v698 = vshll.u32 %v487, 16
      %v700 = vrot.slane %v698, 1
      %v701 = vor.u32 %v696, %v700
      %v703 = vshll.u32 %v535, 16
      %v705 = vrot.slane %v703, 1
      %v706 = vsel %vm538, %v701, %v705
      %v708 = vshrl.u32 %v488, 16
      %v710 = vshll.u32 %v488, 16
      %v712 = vrot.slane %v710, 1
      %v713 = vor.u32 %v708, %v712
      %v715 = vshll.u32 %v536, 16
      %v717 = vrot.slane %v715, 1
      %v718 = vsel %vm538, %v713, %v717
      %v720 = vshrl.u32 %v489, 16
      %v722 = vshll.u32 %v489, 16
      %v724 = vrot.slane %v722, 1
      %v725 = vor.u32 %v720, %v724
      %v727 = vshll.u32 %v537, 16
      %v729 = vrot.slane %v727, 1
      %v730 = vsel %vm538, %v725, %v729
      %731 = vrot.lane.b32.xlu0 %v550, 4
      %v732 = vpop.permute.xlu0 %731
      %733 = vrot.lane.b32.xlu0 %v562, 4
      %v734 = vpop.permute.xlu0 %733
      %735 = vrot.lane.b32.xlu0 %v574, 4
      %v736 = vpop.permute.xlu0 %735
      %737 = vrot.lane.b32.xlu0 %v586, 4
      %v738 = vpop.permute.xlu0 %737
      %739 = vrot.lane.b32.xlu0 %v598, 4
      %v740 = vpop.permute.xlu0 %739
      %741 = vrot.lane.b32.xlu0 %v610, 4
      %v742 = vpop.permute.xlu0 %741
      %743 = vrot.lane.b32.xlu0 %v622, 4
      %v744 = vpop.permute.xlu0 %743
      %745 = vrot.lane.b32.xlu0 %v634, 4
      %v746 = vpop.permute.xlu0 %745
      %747 = vrot.lane.b32.xlu0 %v646, 4
      %v748 = vpop.permute.xlu0 %747
      %749 = vrot.lane.b32.xlu0 %v658, 4
      %v750 = vpop.permute.xlu0 %749
      %751 = vrot.lane.b32.xlu0 %v670, 4
      %v752 = vpop.permute.xlu0 %751
      %753 = vrot.lane.b32.xlu0 %v682, 4
      %v754 = vpop.permute.xlu0 %753
      %755 = vrot.lane.b32.xlu0 %v694, 4
      %v756 = vpop.permute.xlu0 %755
      %757 = vrot.lane.b32.xlu0 %v706, 4
      %v758 = vpop.permute.xlu0 %757
      %759 = vrot.lane.b32.xlu0 %v718, 4
      %v760 = vpop.permute.xlu0 %759
      %761 = vrot.lane.b32.xlu0 %v730, 4
      %v762 = vpop.permute.xlu0 %761
      %v779 = vunpack.c.l.b16 %v264
      %v780 = vunpack.c.l.b16 %v265
      %v781 = vunpack.c.l.b16 %v266
      %v782 = vunpack.c.l.b16 %v267
      %v783 = vunpack.c.l.b16 %v268
      %v784 = vunpack.c.l.b16 %v269
      %v785 = vunpack.c.l.b16 %v270
      %v786 = vunpack.c.l.b16 %v271
      %v787 = vunpack.c.l.b16 %v272
      %v788 = vunpack.c.l.b16 %v273
      %v789 = vunpack.c.l.b16 %v274
      %v790 = vunpack.c.l.b16 %v275
      %v791 = vunpack.c.l.b16 %v276
      %v792 = vunpack.c.l.b16 %v277
      %v793 = vunpack.c.l.b16 %v278
      %v794 = vunpack.c.l.b16 %v279
      %v795 = vpack.c.b16 %v443, %v779
      %v796 = vpack.c.b16 %v445, %v780
      %v797 = vpack.c.b16 %v447, %v781
      %v798 = vpack.c.b16 %v449, %v782
      %v799 = vpack.c.b16 %v451, %v783
      %v800 = vpack.c.b16 %v453, %v784
      %v801 = vpack.c.b16 %v455, %v785
      %v802 = vpack.c.b16 %v457, %v786
      %v803 = vpack.c.b16 %v459, %v787
      %v804 = vpack.c.b16 %v461, %v788
      %v805 = vpack.c.b16 %v463, %v789
      %v806 = vpack.c.b16 %v465, %v790
      %v807 = vpack.c.b16 %v467, %v791
      %v808 = vpack.c.b16 %v469, %v792
      %v809 = vpack.c.b16 %v471, %v793
      %v810 = vpack.c.b16 %v473, %v794
      %vm811 = vcmask 1046528
      %v812 = vrot.slane %v795, 1
      %v813 = vrot.slane %v522, 1
      %v814 = vsel %vm811, %v812, %v813
      %v815 = vrot.slane %v796, 1
      %v816 = vrot.slane %v523, 1
      %v817 = vsel %vm811, %v815, %v816
      %v818 = vrot.slane %v797, 1
      %v819 = vrot.slane %v524, 1
      %v820 = vsel %vm811, %v818, %v819
      %v821 = vrot.slane %v798, 1
      %v822 = vrot.slane %v525, 1
      %v823 = vsel %vm811, %v821, %v822
      %v824 = vrot.slane %v799, 1
      %v825 = vrot.slane %v526, 1
      %v826 = vsel %vm811, %v824, %v825
      %v827 = vrot.slane %v800, 1
      %v828 = vrot.slane %v527, 1
      %v829 = vsel %vm811, %v827, %v828
      %v830 = vrot.slane %v801, 1
      %v831 = vrot.slane %v528, 1
      %v832 = vsel %vm811, %v830, %v831
      %v833 = vrot.slane %v802, 1
      %v834 = vrot.slane %v529, 1
      %v835 = vsel %vm811, %v833, %v834
      %v836 = vrot.slane %v803, 1
      %v837 = vrot.slane %v530, 1
      %v838 = vsel %vm811, %v836, %v837
      %v839 = vrot.slane %v804, 1
      %v840 = vrot.slane %v531, 1
      %v841 = vsel %vm811, %v839, %v840
      %v842 = vrot.slane %v805, 1
      %v843 = vrot.slane %v532, 1
      %v844 = vsel %vm811, %v842, %v843
      %v845 = vrot.slane %v806, 1
      %v846 = vrot.slane %v533, 1
      %v847 = vsel %vm811, %v845, %v846
      %v848 = vrot.slane %v807, 1
      %v849 = vrot.slane %v534, 1
      %v850 = vsel %vm811, %v848, %v849
      %v851 = vrot.slane %v808, 1
      %v852 = vrot.slane %v535, 1
      %v853 = vsel %vm811, %v851, %v852
      %v854 = vrot.slane %v809, 1
      %v855 = vrot.slane %v536, 1
      %v856 = vsel %vm811, %v854, %v855
      %v857 = vrot.slane %v810, 1
      %v858 = vrot.slane %v537, 1
      %v859 = vsel %vm811, %v857, %v858
      %860 = vrot.lane.b32.xlu0 %v814, 8
      %v861 = vpop.permute.xlu0 %860
      %862 = vrot.lane.b32.xlu0 %v817, 8
      %v863 = vpop.permute.xlu0 %862
      %864 = vrot.lane.b32.xlu0 %v820, 8
      %v865 = vpop.permute.xlu0 %864
      %866 = vrot.lane.b32.xlu0 %v823, 8
      %v867 = vpop.permute.xlu0 %866
      %868 = vrot.lane.b32.xlu0 %v826, 8
      %v869 = vpop.permute.xlu0 %868
      %870 = vrot.lane.b32.xlu0 %v829, 8
      %v871 = vpop.permute.xlu0 %870
      %872 = vrot.lane.b32.xlu0 %v832, 8
      %v873 = vpop.permute.xlu0 %872
      %874 = vrot.lane.b32.xlu0 %v835, 8
      %v875 = vpop.permute.xlu0 %874
      %876 = vrot.lane.b32.xlu0 %v838, 8
      %v877 = vpop.permute.xlu0 %876
      %878 = vrot.lane.b32.xlu0 %v841, 8
      %v879 = vpop.permute.xlu0 %878
      %880 = vrot.lane.b32.xlu0 %v844, 8
      %v881 = vpop.permute.xlu0 %880
      %882 = vrot.lane.b32.xlu0 %v847, 8
      %v883 = vpop.permute.xlu0 %882
      %884 = vrot.lane.b32.xlu0 %v850, 8
      %v885 = vpop.permute.xlu0 %884
      %886 = vrot.lane.b32.xlu0 %v853, 8
      %v887 = vpop.permute.xlu0 %886
      %888 = vrot.lane.b32.xlu0 %v856, 8
      %v889 = vpop.permute.xlu0 %888
      %890 = vrot.lane.b32.xlu0 %v859, 8
      %v891 = vpop.permute.xlu0 %890
      %v924 = vunpack.c.l.b16 %v281
      %v925 = vunpack.c.l.b16 %v282
      %v926 = vunpack.c.l.b16 %v283
      %v927 = vunpack.c.l.b16 %v284
      %v928 = vunpack.c.l.b16 %v285
      %v929 = vunpack.c.l.b16 %v286
      %v930 = vunpack.c.l.b16 %v287
      %v931 = vunpack.c.l.b16 %v288
      %v932 = vunpack.c.l.b16 %v289
      %v933 = vunpack.c.l.b16 %v290
      %v934 = vunpack.c.l.b16 %v291
      %v935 = vunpack.c.l.b16 %v292
      %v936 = vunpack.c.l.b16 %v293
      %v937 = vunpack.c.l.b16 %v294
      %v938 = vunpack.c.l.b16 %v295
      %v939 = vunpack.c.l.b16 %v296
      %v940 = vunpack.c.l.b16 %v297
      %v941 = vunpack.c.l.b16 %v298
      %v942 = vunpack.c.l.b16 %v299
      %v943 = vunpack.c.l.b16 %v300
      %v944 = vunpack.c.l.b16 %v301
      %v945 = vunpack.c.l.b16 %v302
      %v946 = vunpack.c.l.b16 %v303
      %v947 = vunpack.c.l.b16 %v304
      %v948 = vunpack.c.l.b16 %v305
      %v949 = vunpack.c.l.b16 %v306
      %v950 = vunpack.c.l.b16 %v307
      %v951 = vunpack.c.l.b16 %v308
      %v952 = vunpack.c.l.b16 %v309
      %v953 = vunpack.c.l.b16 %v310
      %v954 = vunpack.c.l.b16 %v311
      %v955 = vunpack.c.l.b16 %v312
      %v956 = vpack.c.b16 %v925, %v924
      %v957 = vpack.c.b16 %v927, %v926
      %v958 = vpack.c.b16 %v929, %v928
      %v959 = vpack.c.b16 %v931, %v930
      %v960 = vpack.c.b16 %v933, %v932
      %v961 = vpack.c.b16 %v935, %v934
      %v962 = vpack.c.b16 %v937, %v936
      %v963 = vpack.c.b16 %v939, %v938
      %v964 = vpack.c.b16 %v941, %v940
      %v965 = vpack.c.b16 %v943, %v942
      %v966 = vpack.c.b16 %v945, %v944
      %v967 = vpack.c.b16 %v947, %v946
      %v968 = vpack.c.b16 %v949, %v948
      %v969 = vpack.c.b16 %v951, %v950
      %v970 = vpack.c.b16 %v953, %v952
      %v971 = vpack.c.b16 %v955, %v954
      %972 = vrot.lane.b32.xlu0 %v956, 12
      %v973 = vpop.permute.xlu0 %972
      %974 = vrot.lane.b32.xlu0 %v957, 12
      %v975 = vpop.permute.xlu0 %974
      %976 = vrot.lane.b32.xlu0 %v958, 12
      %v977 = vpop.permute.xlu0 %976
      %978 = vrot.lane.b32.xlu0 %v959, 12
      %v979 = vpop.permute.xlu0 %978
      %980 = vrot.lane.b32.xlu0 %v960, 12
      %v981 = vpop.permute.xlu0 %980
      %982 = vrot.lane.b32.xlu0 %v961, 12
      %v983 = vpop.permute.xlu0 %982
      %984 = vrot.lane.b32.xlu0 %v962, 12
      %v985 = vpop.permute.xlu0 %984
      %986 = vrot.lane.b32.xlu0 %v963, 12
      %v987 = vpop.permute.xlu0 %986
      %988 = vrot.lane.b32.xlu0 %v964, 12
      %v989 = vpop.permute.xlu0 %988
      %990 = vrot.lane.b32.xlu0 %v965, 12
      %v991 = vpop.permute.xlu0 %990
      %992 = vrot.lane.b32.xlu0 %v966, 12
      %v993 = vpop.permute.xlu0 %992
      %994 = vrot.lane.b32.xlu0 %v967, 12
      %v995 = vpop.permute.xlu0 %994
      %996 = vrot.lane.b32.xlu0 %v968, 12
      %v997 = vpop.permute.xlu0 %996
      %998 = vrot.lane.b32.xlu0 %v969, 12
      %v999 = vpop.permute.xlu0 %998
      %1000 = vrot.lane.b32.xlu0 %v970, 12
      %v1001 = vpop.permute.xlu0 %1000
      %1002 = vrot.lane.b32.xlu0 %v971, 12
      %v1003 = vpop.permute.xlu0 %1002
      %v1020 = vunpack.c.l.b16 %v313
      %v1021 = vunpack.c.l.b16 %v314
      %v1022 = vunpack.c.l.b16 %v315
      %v1023 = vunpack.c.l.b16 %v316
      %v1024 = vunpack.c.l.b16 %v317
      %v1025 = vunpack.c.l.b16 %v318
      %v1026 = vunpack.c.l.b16 %v319
      %v1027 = vunpack.c.l.b16 %v320
      %v1028 = vunpack.c.l.b16 %v321
      %v1029 = vunpack.c.l.b16 %v322
      %v1030 = vunpack.c.l.b16 %v323
      %v1031 = vunpack.c.l.b16 %v324
      %v1032 = vunpack.c.l.b16 %v325
      %v1033 = vunpack.c.l.b16 %v326
      %v1034 = vunpack.c.l.b16 %v327
      %v1035 = vunpack.c.l.b16 %v328
      %v1036 = vpack.c.b16 %v1020, %v1020
      %v1037 = vpack.c.b16 %v1021, %v1021
      %v1038 = vpack.c.b16 %v1022, %v1022
      %v1039 = vpack.c.b16 %v1023, %v1023
      %v1040 = vpack.c.b16 %v1024, %v1024
      %v1041 = vpack.c.b16 %v1025, %v1025
      %v1042 = vpack.c.b16 %v1026, %v1026
      %v1043 = vpack.c.b16 %v1027, %v1027
      %v1044 = vpack.c.b16 %v1028, %v1028
      %v1045 = vpack.c.b16 %v1029, %v1029
      %v1046 = vpack.c.b16 %v1030, %v1030
      %v1047 = vpack.c.b16 %v1031, %v1031
      %v1048 = vpack.c.b16 %v1032, %v1032
      %v1049 = vpack.c.b16 %v1033, %v1033
      %v1050 = vpack.c.b16 %v1034, %v1034
      %v1051 = vpack.c.b16 %v1035, %v1035
      %v1053 = vshrl.u32 %v956, 16
      %v1055 = vshll.u32 %v956, 16
      %v1057 = vrot.slane %v1055, 1
      %v1058 = vor.u32 %v1053, %v1057
      %v1060 = vshll.u32 %v1036, 16
      %v1062 = vrot.slane %v1060, 1
      %v1063 = vsel %vm538, %v1058, %v1062
      %v1065 = vshrl.u32 %v957, 16
      %v1067 = vshll.u32 %v957, 16
      %v1069 = vrot.slane %v1067, 1
      %v1070 = vor.u32 %v1065, %v1069
      %v1072 = vshll.u32 %v1037, 16
      %v1074 = vrot.slane %v1072, 1
      %v1075 = vsel %vm538, %v1070, %v1074
      %v1077 = vshrl.u32 %v958, 16
      %v1079 = vshll.u32 %v958, 16
      %v1081 = vrot.slane %v1079, 1
      %v1082 = vor.u32 %v1077, %v1081
      %v1084 = vshll.u32 %v1038, 16
      %v1086 = vrot.slane %v1084, 1
      %v1087 = vsel %vm538, %v1082, %v1086
      %v1089 = vshrl.u32 %v959, 16
      %v1091 = vshll.u32 %v959, 16
      %v1093 = vrot.slane %v1091, 1
      %v1094 = vor.u32 %v1089, %v1093
      %v1096 = vshll.u32 %v1039, 16
      %v1098 = vrot.slane %v1096, 1
      %v1099 = vsel %vm538, %v1094, %v1098
      %v1101 = vshrl.u32 %v960, 16
      %v1103 = vshll.u32 %v960, 16
      %v1105 = vrot.slane %v1103, 1
      %v1106 = vor.u32 %v1101, %v1105
      %v1108 = vshll.u32 %v1040, 16
      %v1110 = vrot.slane %v1108, 1
      %v1111 = vsel %vm538, %v1106, %v1110
      %v1113 = vshrl.u32 %v961, 16
      %v1115 = vshll.u32 %v961, 16
      %v1117 = vrot.slane %v1115, 1
      %v1118 = vor.u32 %v1113, %v1117
      %v1120 = vshll.u32 %v1041, 16
      %v1122 = vrot.slane %v1120, 1
      %v1123 = vsel %vm538, %v1118, %v1122
      %v1125 = vshrl.u32 %v962, 16
      %v1127 = vshll.u32 %v962, 16
      %v1129 = vrot.slane %v1127, 1
      %v1130 = vor.u32 %v1125, %v1129
      %v1132 = vshll.u32 %v1042, 16
      %v1134 = vrot.slane %v1132, 1
      %v1135 = vsel %vm538, %v1130, %v1134
      %v1137 = vshrl.u32 %v963, 16
      %v1139 = vshll.u32 %v963, 16
      %v1141 = vrot.slane %v1139, 1
      %v1142 = vor.u32 %v1137, %v1141
      %v1144 = vshll.u32 %v1043, 16
      %v1146 = vrot.slane %v1144, 1
      %v1147 = vsel %vm538, %v1142, %v1146
      %v1149 = vshrl.u32 %v964, 16
      %v1151 = vshll.u32 %v964, 16
      %v1153 = vrot.slane %v1151, 1
      %v1154 = vor.u32 %v1149, %v1153
      %v1156 = vshll.u32 %v1044, 16
      %v1158 = vrot.slane %v1156, 1
      %v1159 = vsel %vm538, %v1154, %v1158
      %v1161 = vshrl.u32 %v965, 16
      %v1163 = vshll.u32 %v965, 16
      %v1165 = vrot.slane %v1163, 1
      %v1166 = vor.u32 %v1161, %v1165
      %v1168 = vshll.u32 %v1045, 16
      %v1170 = vrot.slane %v1168, 1
      %v1171 = vsel %vm538, %v1166, %v1170
      %v1173 = vshrl.u32 %v966, 16
      %v1175 = vshll.u32 %v966, 16
      %v1177 = vrot.slane %v1175, 1
      %v1178 = vor.u32 %v1173, %v1177
      %v1180 = vshll.u32 %v1046, 16
      %v1182 = vrot.slane %v1180, 1
      %v1183 = vsel %vm538, %v1178, %v1182
      %v1185 = vshrl.u32 %v967, 16
      %v1187 = vshll.u32 %v967, 16
      %v1189 = vrot.slane %v1187, 1
      %v1190 = vor.u32 %v1185, %v1189
      %v1192 = vshll.u32 %v1047, 16
      %v1194 = vrot.slane %v1192, 1
      %v1195 = vsel %vm538, %v1190, %v1194
      %v1197 = vshrl.u32 %v968, 16
      %v1199 = vshll.u32 %v968, 16
      %v1201 = vrot.slane %v1199, 1
      %v1202 = vor.u32 %v1197, %v1201
      %v1204 = vshll.u32 %v1048, 16
      %v1206 = vrot.slane %v1204, 1
      %v1207 = vsel %vm538, %v1202, %v1206
      %v1209 = vshrl.u32 %v969, 16
      %v1211 = vshll.u32 %v969, 16
      %v1213 = vrot.slane %v1211, 1
      %v1214 = vor.u32 %v1209, %v1213
      %v1216 = vshll.u32 %v1049, 16
      %v1218 = vrot.slane %v1216, 1
      %v1219 = vsel %vm538, %v1214, %v1218
      %v1221 = vshrl.u32 %v970, 16
      %v1223 = vshll.u32 %v970, 16
      %v1225 = vrot.slane %v1223, 1
      %v1226 = vor.u32 %v1221, %v1225
      %v1228 = vshll.u32 %v1050, 16
      %v1230 = vrot.slane %v1228, 1
      %v1231 = vsel %vm538, %v1226, %v1230
      %v1233 = vshrl.u32 %v971, 16
      %v1235 = vshll.u32 %v971, 16
      %v1237 = vrot.slane %v1235, 1
      %v1238 = vor.u32 %v1233, %v1237
      %v1240 = vshll.u32 %v1051, 16
      %v1242 = vrot.slane %v1240, 1
      %v1243 = vsel %vm538, %v1238, %v1242
      %1244 = vrot.lane.b32.xlu0 %v1063, 16
      %v1245 = vpop.permute.xlu0 %1244
      %1246 = vrot.lane.b32.xlu0 %v1075, 16
      %v1247 = vpop.permute.xlu0 %1246
      %1248 = vrot.lane.b32.xlu0 %v1087, 16
      %v1249 = vpop.permute.xlu0 %1248
      %1250 = vrot.lane.b32.xlu0 %v1099, 16
      %v1251 = vpop.permute.xlu0 %1250
      %1252 = vrot.lane.b32.xlu0 %v1111, 16
      %v1253 = vpop.permute.xlu0 %1252
      %1254 = vrot.lane.b32.xlu0 %v1123, 16
      %v1255 = vpop.permute.xlu0 %1254
      %1256 = vrot.lane.b32.xlu0 %v1135, 16
      %v1257 = vpop.permute.xlu0 %1256
      %1258 = vrot.lane.b32.xlu0 %v1147, 16
      %v1259 = vpop.permute.xlu0 %1258
      %1260 = vrot.lane.b32.xlu0 %v1159, 16
      %v1261 = vpop.permute.xlu0 %1260
      %1262 = vrot.lane.b32.xlu0 %v1171, 16
      %v1263 = vpop.permute.xlu0 %1262
      %1264 = vrot.lane.b32.xlu0 %v1183, 16
      %v1265 = vpop.permute.xlu0 %1264
      %1266 = vrot.lane.b32.xlu0 %v1195, 16
      %v1267 = vpop.permute.xlu0 %1266
      %1268 = vrot.lane.b32.xlu0 %v1207, 16
      %v1269 = vpop.permute.xlu0 %1268
      %1270 = vrot.lane.b32.xlu0 %v1219, 16
      %v1271 = vpop.permute.xlu0 %1270
      %1272 = vrot.lane.b32.xlu0 %v1231, 16
      %v1273 = vpop.permute.xlu0 %1272
      %1274 = vrot.lane.b32.xlu0 %v1243, 16
      %v1275 = vpop.permute.xlu0 %1274
      %v1292 = vunpack.c.l.b16 %v329
      %v1293 = vunpack.c.l.b16 %v330
      %v1294 = vunpack.c.l.b16 %v331
      %v1295 = vunpack.c.l.b16 %v332
      %v1296 = vunpack.c.l.b16 %v333
      %v1297 = vunpack.c.l.b16 %v334
      %v1298 = vunpack.c.l.b16 %v335
      %v1299 = vunpack.c.l.b16 %v336
      %v1300 = vunpack.c.l.b16 %v337
      %v1301 = vunpack.c.l.b16 %v338
      %v1302 = vunpack.c.l.b16 %v339
      %v1303 = vunpack.c.l.b16 %v340
      %v1304 = vunpack.c.l.b16 %v341
      %v1305 = vunpack.c.l.b16 %v342
      %v1306 = vunpack.c.l.b16 %v343
      %v1307 = vunpack.c.l.b16 %v344
      %v1308 = vpack.c.b16 %v925, %v1292
      %v1309 = vpack.c.b16 %v927, %v1293
      %v1310 = vpack.c.b16 %v929, %v1294
      %v1311 = vpack.c.b16 %v931, %v1295
      %v1312 = vpack.c.b16 %v933, %v1296
      %v1313 = vpack.c.b16 %v935, %v1297
      %v1314 = vpack.c.b16 %v937, %v1298
      %v1315 = vpack.c.b16 %v939, %v1299
      %v1316 = vpack.c.b16 %v941, %v1300
      %v1317 = vpack.c.b16 %v943, %v1301
      %v1318 = vpack.c.b16 %v945, %v1302
      %v1319 = vpack.c.b16 %v947, %v1303
      %v1320 = vpack.c.b16 %v949, %v1304
      %v1321 = vpack.c.b16 %v951, %v1305
      %v1322 = vpack.c.b16 %v953, %v1306
      %v1323 = vpack.c.b16 %v955, %v1307
      %v1324 = vrot.slane %v1308, 1
      %v1325 = vrot.slane %v1036, 1
      %v1326 = vsel %vm811, %v1324, %v1325
      %v1327 = vrot.slane %v1309, 1
      %v1328 = vrot.slane %v1037, 1
      %v1329 = vsel %vm811, %v1327, %v1328
      %v1330 = vrot.slane %v1310, 1
      %v1331 = vrot.slane %v1038, 1
      %v1332 = vsel %vm811, %v1330, %v1331
      %v1333 = vrot.slane %v1311, 1
      %v1334 = vrot.slane %v1039, 1
      %v1335 = vsel %vm811, %v1333, %v1334
      %v1336 = vrot.slane %v1312, 1
      %v1337 = vrot.slane %v1040, 1
      %v1338 = vsel %vm811, %v1336, %v1337
      %v1339 = vrot.slane %v1313, 1
      %v1340 = vrot.slane %v1041, 1
      %v1341 = vsel %vm811, %v1339, %v1340
      %v1342 = vrot.slane %v1314, 1
      %v1343 = vrot.slane %v1042, 1
      %v1344 = vsel %vm811, %v1342, %v1343
      %v1345 = vrot.slane %v1315, 1
      %v1346 = vrot.slane %v1043, 1
      %v1347 = vsel %vm811, %v1345, %v1346
      %v1348 = vrot.slane %v1316, 1
      %v1349 = vrot.slane %v1044, 1
      %v1350 = vsel %vm811, %v1348, %v1349
      %v1351 = vrot.slane %v1317, 1
      %v1352 = vrot.slane %v1045, 1
      %v1353 = vsel %vm811, %v1351, %v1352
      %v1354 = vrot.slane %v1318, 1
      %v1355 = vrot.slane %v1046, 1
      %v1356 = vsel %vm811, %v1354, %v1355
      %v1357 = vrot.slane %v1319, 1
      %v1358 = vrot.slane %v1047, 1
      %v1359 = vsel %vm811, %v1357, %v1358
      %v1360 = vrot.slane %v1320, 1
      %v1361 = vrot.slane %v1048, 1
      %v1362 = vsel %vm811, %v1360, %v1361
      %v1363 = vrot.slane %v1321, 1
      %v1364 = vrot.slane %v1049, 1
      %v1365 = vsel %vm811, %v1363, %v1364
      %v1366 = vrot.slane %v1322, 1
      %v1367 = vrot.slane %v1050, 1
      %v1368 = vsel %vm811, %v1366, %v1367
      %v1369 = vrot.slane %v1323, 1
      %v1370 = vrot.slane %v1051, 1
      %v1371 = vsel %vm811, %v1369, %v1370
      %1372 = vrot.lane.b32.xlu0 %v1326, 20
      %v1373 = vpop.permute.xlu0 %1372
      %1374 = vrot.lane.b32.xlu0 %v1329, 20
      %v1375 = vpop.permute.xlu0 %1374
      %1376 = vrot.lane.b32.xlu0 %v1332, 20
      %v1377 = vpop.permute.xlu0 %1376
      %1378 = vrot.lane.b32.xlu0 %v1335, 20
      %v1379 = vpop.permute.xlu0 %1378
      %1380 = vrot.lane.b32.xlu0 %v1338, 20
      %v1381 = vpop.permute.xlu0 %1380
      %1382 = vrot.lane.b32.xlu0 %v1341, 20
      %v1383 = vpop.permute.xlu0 %1382
      %1384 = vrot.lane.b32.xlu0 %v1344, 20
      %v1385 = vpop.permute.xlu0 %1384
      %1386 = vrot.lane.b32.xlu0 %v1347, 20
      %v1387 = vpop.permute.xlu0 %1386
      %1388 = vrot.lane.b32.xlu0 %v1350, 20
      %v1389 = vpop.permute.xlu0 %1388
      %1390 = vrot.lane.b32.xlu0 %v1353, 20
      %v1391 = vpop.permute.xlu0 %1390
      %1392 = vrot.lane.b32.xlu0 %v1356, 20
      %v1393 = vpop.permute.xlu0 %1392
      %1394 = vrot.lane.b32.xlu0 %v1359, 20
      %v1395 = vpop.permute.xlu0 %1394
      %1396 = vrot.lane.b32.xlu0 %v1362, 20
      %v1397 = vpop.permute.xlu0 %1396
      %1398 = vrot.lane.b32.xlu0 %v1365, 20
      %v1399 = vpop.permute.xlu0 %1398
      %1400 = vrot.lane.b32.xlu0 %v1368, 20
      %v1401 = vpop.permute.xlu0 %1400
      %1402 = vrot.lane.b32.xlu0 %v1371, 20
      %v1403 = vpop.permute.xlu0 %1402
      %v1436 = vunpack.c.l.b16 %v346
      %v1437 = vunpack.c.l.b16 %v347
      %v1438 = vunpack.c.l.b16 %v348
      %v1439 = vunpack.c.l.b16 %v349
      %v1440 = vunpack.c.l.b16 %v350
      %v1441 = vunpack.c.l.b16 %v351
      %v1442 = vunpack.c.l.b16 %v352
      %v1443 = vunpack.c.l.b16 %v353
      %v1444 = vunpack.c.l.b16 %v354
      %v1445 = vunpack.c.l.b16 %v355
      %v1446 = vunpack.c.l.b16 %v356
      %v1447 = vunpack.c.l.b16 %v357
      %v1448 = vunpack.c.l.b16 %v358
      %v1449 = vunpack.c.l.b16 %v359
      %v1450 = vunpack.c.l.b16 %v360
      %v1451 = vunpack.c.l.b16 %v361
      %v1452 = vunpack.c.l.b16 %v362
      %v1453 = vunpack.c.l.b16 %v363
      %v1454 = vunpack.c.l.b16 %v364
      %v1455 = vunpack.c.l.b16 %v365
      %v1456 = vunpack.c.l.b16 %v366
      %v1457 = vunpack.c.l.b16 %v367
      %v1458 = vunpack.c.l.b16 %v368
      %v1459 = vunpack.c.l.b16 %v369
      %v1460 = vunpack.c.l.b16 %v370
      %v1461 = vunpack.c.l.b16 %v371
      %v1462 = vunpack.c.l.b16 %v372
      %v1463 = vunpack.c.l.b16 %v373
      %v1464 = vunpack.c.l.b16 %v374
      %v1465 = vunpack.c.l.b16 %v375
      %v1466 = vunpack.c.l.b16 %v376
      %v1467 = vunpack.c.l.b16 %v377
      %v1468 = vpack.c.b16 %v1437, %v1436
      %v1469 = vpack.c.b16 %v1439, %v1438
      %v1470 = vpack.c.b16 %v1441, %v1440
      %v1471 = vpack.c.b16 %v1443, %v1442
      %v1472 = vpack.c.b16 %v1445, %v1444
      %v1473 = vpack.c.b16 %v1447, %v1446
      %v1474 = vpack.c.b16 %v1449, %v1448
      %v1475 = vpack.c.b16 %v1451, %v1450
      %v1476 = vpack.c.b16 %v1453, %v1452
      %v1477 = vpack.c.b16 %v1455, %v1454
      %v1478 = vpack.c.b16 %v1457, %v1456
      %v1479 = vpack.c.b16 %v1459, %v1458
      %v1480 = vpack.c.b16 %v1461, %v1460
      %v1481 = vpack.c.b16 %v1463, %v1462
      %v1482 = vpack.c.b16 %v1465, %v1464
      %v1483 = vpack.c.b16 %v1467, %v1466
      %1484 = vrot.lane.b32.xlu0 %v1468, 24
      %v1485 = vpop.permute.xlu0 %1484
      %1486 = vrot.lane.b32.xlu0 %v1469, 24
      %v1487 = vpop.permute.xlu0 %1486
      %1488 = vrot.lane.b32.xlu0 %v1470, 24
      %v1489 = vpop.permute.xlu0 %1488
      %1490 = vrot.lane.b32.xlu0 %v1471, 24
      %v1491 = vpop.permute.xlu0 %1490
      %1492 = vrot.lane.b32.xlu0 %v1472, 24
      %v1493 = vpop.permute.xlu0 %1492
      %1494 = vrot.lane.b32.xlu0 %v1473, 24
      %v1495 = vpop.permute.xlu0 %1494
      %1496 = vrot.lane.b32.xlu0 %v1474, 24
      %v1497 = vpop.permute.xlu0 %1496
      %1498 = vrot.lane.b32.xlu0 %v1475, 24
      %v1499 = vpop.permute.xlu0 %1498
      %1500 = vrot.lane.b32.xlu0 %v1476, 24
      %v1501 = vpop.permute.xlu0 %1500
      %1502 = vrot.lane.b32.xlu0 %v1477, 24
      %v1503 = vpop.permute.xlu0 %1502
      %1504 = vrot.lane.b32.xlu0 %v1478, 24
      %v1505 = vpop.permute.xlu0 %1504
      %1506 = vrot.lane.b32.xlu0 %v1479, 24
      %v1507 = vpop.permute.xlu0 %1506
      %1508 = vrot.lane.b32.xlu0 %v1480, 24
      %v1509 = vpop.permute.xlu0 %1508
      %1510 = vrot.lane.b32.xlu0 %v1481, 24
      %v1511 = vpop.permute.xlu0 %1510
      %1512 = vrot.lane.b32.xlu0 %v1482, 24
      %v1513 = vpop.permute.xlu0 %1512
      %1514 = vrot.lane.b32.xlu0 %v1483, 24
      %v1515 = vpop.permute.xlu0 %1514
      %v1532 = vunpack.c.l.b16 %v378
      %v1533 = vunpack.c.l.b16 %v379
      %v1534 = vunpack.c.l.b16 %v380
      %v1535 = vunpack.c.l.b16 %v381
      %v1536 = vunpack.c.l.b16 %v382
      %v1537 = vunpack.c.l.b16 %v383
      %v1538 = vunpack.c.l.b16 %v384
      %v1539 = vunpack.c.l.b16 %v385
      %v1540 = vunpack.c.l.b16 %v386
      %v1541 = vunpack.c.l.b16 %v387
      %v1542 = vunpack.c.l.b16 %v388
      %v1543 = vunpack.c.l.b16 %v389
      %v1544 = vunpack.c.l.b16 %v390
      %v1545 = vunpack.c.l.b16 %v391
      %v1546 = vunpack.c.l.b16 %v392
      %v1547 = vunpack.c.l.b16 %v393
      %v1548 = vpack.c.b16 %v1532, %v1532
      %v1549 = vpack.c.b16 %v1533, %v1533
      %v1550 = vpack.c.b16 %v1534, %v1534
      %v1551 = vpack.c.b16 %v1535, %v1535
      %v1552 = vpack.c.b16 %v1536, %v1536
      %v1553 = vpack.c.b16 %v1537, %v1537
      %v1554 = vpack.c.b16 %v1538, %v1538
      %v1555 = vpack.c.b16 %v1539, %v1539
      %v1556 = vpack.c.b16 %v1540, %v1540
      %v1557 = vpack.c.b16 %v1541, %v1541
      %v1558 = vpack.c.b16 %v1542, %v1542
      %v1559 = vpack.c.b16 %v1543, %v1543
      %v1560 = vpack.c.b16 %v1544, %v1544
      %v1561 = vpack.c.b16 %v1545, %v1545
      %v1562 = vpack.c.b16 %v1546, %v1546
      %v1563 = vpack.c.b16 %v1547, %v1547
      %v1565 = vshrl.u32 %v1468, 16
      %v1567 = vshll.u32 %v1468, 16
      %v1569 = vrot.slane %v1567, 1
      %v1570 = vor.u32 %v1565, %v1569
      %v1572 = vshll.u32 %v1548, 16
      %v1574 = vrot.slane %v1572, 1
      %v1575 = vsel %vm538, %v1570, %v1574
      %v1577 = vshrl.u32 %v1469, 16
      %v1579 = vshll.u32 %v1469, 16
      %v1581 = vrot.slane %v1579, 1
      %v1582 = vor.u32 %v1577, %v1581
      %v1584 = vshll.u32 %v1549, 16
      %v1586 = vrot.slane %v1584, 1
      %v1587 = vsel %vm538, %v1582, %v1586
      %v1589 = vshrl.u32 %v1470, 16
      %v1591 = vshll.u32 %v1470, 16
      %v1593 = vrot.slane %v1591, 1
      %v1594 = vor.u32 %v1589, %v1593
      %v1596 = vshll.u32 %v1550, 16
      %v1598 = vrot.slane %v1596, 1
      %v1599 = vsel %vm538, %v1594, %v1598
      %v1601 = vshrl.u32 %v1471, 16
      %v1603 = vshll.u32 %v1471, 16
      %v1605 = vrot.slane %v1603, 1
      %v1606 = vor.u32 %v1601, %v1605
      %v1608 = vshll.u32 %v1551, 16
      %v1610 = vrot.slane %v1608, 1
      %v1611 = vsel %vm538, %v1606, %v1610
      %v1613 = vshrl.u32 %v1472, 16
      %v1615 = vshll.u32 %v1472, 16
      %v1617 = vrot.slane %v1615, 1
      %v1618 = vor.u32 %v1613, %v1617
      %v1620 = vshll.u32 %v1552, 16
      %v1622 = vrot.slane %v1620, 1
      %v1623 = vsel %vm538, %v1618, %v1622
      %v1625 = vshrl.u32 %v1473, 16
      %v1627 = vshll.u32 %v1473, 16
      %v1629 = vrot.slane %v1627, 1
      %v1630 = vor.u32 %v1625, %v1629
      %v1632 = vshll.u32 %v1553, 16
      %v1634 = vrot.slane %v1632, 1
      %v1635 = vsel %vm538, %v1630, %v1634
      %v1637 = vshrl.u32 %v1474, 16
      %v1639 = vshll.u32 %v1474, 16
      %v1641 = vrot.slane %v1639, 1
      %v1642 = vor.u32 %v1637, %v1641
      %v1644 = vshll.u32 %v1554, 16
      %v1646 = vrot.slane %v1644, 1
      %v1647 = vsel %vm538, %v1642, %v1646
      %v1649 = vshrl.u32 %v1475, 16
      %v1651 = vshll.u32 %v1475, 16
      %v1653 = vrot.slane %v1651, 1
      %v1654 = vor.u32 %v1649, %v1653
      %v1656 = vshll.u32 %v1555, 16
      %v1658 = vrot.slane %v1656, 1
      %v1659 = vsel %vm538, %v1654, %v1658
      %v1661 = vshrl.u32 %v1476, 16
      %v1663 = vshll.u32 %v1476, 16
      %v1665 = vrot.slane %v1663, 1
      %v1666 = vor.u32 %v1661, %v1665
      %v1668 = vshll.u32 %v1556, 16
      %v1670 = vrot.slane %v1668, 1
      %v1671 = vsel %vm538, %v1666, %v1670
      %v1673 = vshrl.u32 %v1477, 16
      %v1675 = vshll.u32 %v1477, 16
      %v1677 = vrot.slane %v1675, 1
      %v1678 = vor.u32 %v1673, %v1677
      %v1680 = vshll.u32 %v1557, 16
      %v1682 = vrot.slane %v1680, 1
      %v1683 = vsel %vm538, %v1678, %v1682
      %v1685 = vshrl.u32 %v1478, 16
      %v1687 = vshll.u32 %v1478, 16
      %v1689 = vrot.slane %v1687, 1
      %v1690 = vor.u32 %v1685, %v1689
      %v1692 = vshll.u32 %v1558, 16
      %v1694 = vrot.slane %v1692, 1
      %v1695 = vsel %vm538, %v1690, %v1694
      %v1697 = vshrl.u32 %v1479, 16
      %v1699 = vshll.u32 %v1479, 16
      %v1701 = vrot.slane %v1699, 1
      %v1702 = vor.u32 %v1697, %v1701
      %v1704 = vshll.u32 %v1559, 16
      %v1706 = vrot.slane %v1704, 1
      %v1707 = vsel %vm538, %v1702, %v1706
      %v1709 = vshrl.u32 %v1480, 16
      %v1711 = vshll.u32 %v1480, 16
      %v1713 = vrot.slane %v1711, 1
      %v1714 = vor.u32 %v1709, %v1713
      %v1716 = vshll.u32 %v1560, 16
      %v1718 = vrot.slane %v1716, 1
      %v1719 = vsel %vm538, %v1714, %v1718
      %v1721 = vshrl.u32 %v1481, 16
      %v1723 = vshll.u32 %v1481, 16
      %v1725 = vrot.slane %v1723, 1
      %v1726 = vor.u32 %v1721, %v1725
      %v1728 = vshll.u32 %v1561, 16
      %v1730 = vrot.slane %v1728, 1
      %v1731 = vsel %vm538, %v1726, %v1730
      %v1733 = vshrl.u32 %v1482, 16
      %v1735 = vshll.u32 %v1482, 16
      %v1737 = vrot.slane %v1735, 1
      %v1738 = vor.u32 %v1733, %v1737
      %v1740 = vshll.u32 %v1562, 16
      %v1742 = vrot.slane %v1740, 1
      %v1743 = vsel %vm538, %v1738, %v1742
      %v1745 = vshrl.u32 %v1483, 16
      %v1747 = vshll.u32 %v1483, 16
      %v1749 = vrot.slane %v1747, 1
      %v1750 = vor.u32 %v1745, %v1749
      %v1752 = vshll.u32 %v1563, 16
      %v1754 = vrot.slane %v1752, 1
      %v1755 = vsel %vm538, %v1750, %v1754
      %1756 = vrot.lane.b32.xlu0 %v1575, 28
      %v1757 = vpop.permute.xlu0 %1756
      %1758 = vrot.lane.b32.xlu0 %v1587, 28
      %v1759 = vpop.permute.xlu0 %1758
      %1760 = vrot.lane.b32.xlu0 %v1599, 28
      %v1761 = vpop.permute.xlu0 %1760
      %1762 = vrot.lane.b32.xlu0 %v1611, 28
      %v1763 = vpop.permute.xlu0 %1762
      %1764 = vrot.lane.b32.xlu0 %v1623, 28
      %v1765 = vpop.permute.xlu0 %1764
      %1766 = vrot.lane.b32.xlu0 %v1635, 28
      %v1767 = vpop.permute.xlu0 %1766
      %1768 = vrot.lane.b32.xlu0 %v1647, 28
      %v1769 = vpop.permute.xlu0 %1768
      %1770 = vrot.lane.b32.xlu0 %v1659, 28
      %v1771 = vpop.permute.xlu0 %1770
      %1772 = vrot.lane.b32.xlu0 %v1671, 28
      %v1773 = vpop.permute.xlu0 %1772
      %1774 = vrot.lane.b32.xlu0 %v1683, 28
      %v1775 = vpop.permute.xlu0 %1774
      %1776 = vrot.lane.b32.xlu0 %v1695, 28
      %v1777 = vpop.permute.xlu0 %1776
      %1778 = vrot.lane.b32.xlu0 %v1707, 28
      %v1779 = vpop.permute.xlu0 %1778
      %1780 = vrot.lane.b32.xlu0 %v1719, 28
      %v1781 = vpop.permute.xlu0 %1780
      %1782 = vrot.lane.b32.xlu0 %v1731, 28
      %v1783 = vpop.permute.xlu0 %1782
      %1784 = vrot.lane.b32.xlu0 %v1743, 28
      %v1785 = vpop.permute.xlu0 %1784
      %1786 = vrot.lane.b32.xlu0 %v1755, 28
      %v1787 = vpop.permute.xlu0 %1786
      %v1804 = vunpack.c.l.b16 %v394
      %v1805 = vunpack.c.l.b16 %v395
      %v1806 = vunpack.c.l.b16 %v396
      %v1807 = vunpack.c.l.b16 %v397
      %v1808 = vunpack.c.l.b16 %v398
      %v1809 = vunpack.c.l.b16 %v399
      %v1810 = vunpack.c.l.b16 %v400
      %v1811 = vunpack.c.l.b16 %v401
      %v1812 = vunpack.c.l.b16 %v402
      %v1813 = vunpack.c.l.b16 %v403
      %v1814 = vunpack.c.l.b16 %v404
      %v1815 = vunpack.c.l.b16 %v405
      %v1816 = vunpack.c.l.b16 %v406
      %v1817 = vunpack.c.l.b16 %v407
      %v1818 = vunpack.c.l.b16 %v408
      %v1819 = vunpack.c.l.b16 %v409
      %v1820 = vpack.c.b16 %v1437, %v1804
      %v1821 = vpack.c.b16 %v1439, %v1805
      %v1822 = vpack.c.b16 %v1441, %v1806
      %v1823 = vpack.c.b16 %v1443, %v1807
      %v1824 = vpack.c.b16 %v1445, %v1808
      %v1825 = vpack.c.b16 %v1447, %v1809
      %v1826 = vpack.c.b16 %v1449, %v1810
      %v1827 = vpack.c.b16 %v1451, %v1811
      %v1828 = vpack.c.b16 %v1453, %v1812
      %v1829 = vpack.c.b16 %v1455, %v1813
      %v1830 = vpack.c.b16 %v1457, %v1814
      %v1831 = vpack.c.b16 %v1459, %v1815
      %v1832 = vpack.c.b16 %v1461, %v1816
      %v1833 = vpack.c.b16 %v1463, %v1817
      %v1834 = vpack.c.b16 %v1465, %v1818
      %v1835 = vpack.c.b16 %v1467, %v1819
      %v1836 = vrot.slane %v1820, 1
      %v1837 = vrot.slane %v1548, 1
      %v1838 = vsel %vm811, %v1836, %v1837
      %v1839 = vrot.slane %v1821, 1
      %v1840 = vrot.slane %v1549, 1
      %v1841 = vsel %vm811, %v1839, %v1840
      %v1842 = vrot.slane %v1822, 1
      %v1843 = vrot.slane %v1550, 1
      %v1844 = vsel %vm811, %v1842, %v1843
      %v1845 = vrot.slane %v1823, 1
      %v1846 = vrot.slane %v1551, 1
      %v1847 = vsel %vm811, %v1845, %v1846
      %v1848 = vrot.slane %v1824, 1
      %v1849 = vrot.slane %v1552, 1
      %v1850 = vsel %vm811, %v1848, %v1849
      %v1851 = vrot.slane %v1825, 1
      %v1852 = vrot.slane %v1553, 1
      %v1853 = vsel %vm811, %v1851, %v1852
      %v1854 = vrot.slane %v1826, 1
      %v1855 = vrot.slane %v1554, 1
      %v1856 = vsel %vm811, %v1854, %v1855
      %v1857 = vrot.slane %v1827, 1
      %v1858 = vrot.slane %v1555, 1
      %v1859 = vsel %vm811, %v1857, %v1858
      %v1860 = vrot.slane %v1828, 1
      %v1861 = vrot.slane %v1556, 1
      %v1862 = vsel %vm811, %v1860, %v1861
      %v1863 = vrot.slane %v1829, 1
      %v1864 = vrot.slane %v1557, 1
      %v1865 = vsel %vm811, %v1863, %v1864
      %v1866 = vrot.slane %v1830, 1
      %v1867 = vrot.slane %v1558, 1
      %v1868 = vsel %vm811, %v1866, %v1867
      %v1869 = vrot.slane %v1831, 1
      %v1870 = vrot.slane %v1559, 1
      %v1871 = vsel %vm811, %v1869, %v1870
      %v1872 = vrot.slane %v1832, 1
      %v1873 = vrot.slane %v1560, 1
      %v1874 = vsel %vm811, %v1872, %v1873
      %v1875 = vrot.slane %v1833, 1
      %v1876 = vrot.slane %v1561, 1
      %v1877 = vsel %vm811, %v1875, %v1876
      %v1878 = vrot.slane %v1834, 1
      %v1879 = vrot.slane %v1562, 1
      %v1880 = vsel %vm811, %v1878, %v1879
      %v1881 = vrot.slane %v1835, 1
      %v1882 = vrot.slane %v1563, 1
      %v1883 = vsel %vm811, %v1881, %v1882
      %1884 = vrot.lane.b32.xlu0 %v1838, 32
      %v1885 = vpop.permute.xlu0 %1884
      %1886 = vrot.lane.b32.xlu0 %v1841, 32
      %v1887 = vpop.permute.xlu0 %1886
      %1888 = vrot.lane.b32.xlu0 %v1844, 32
      %v1889 = vpop.permute.xlu0 %1888
      %1890 = vrot.lane.b32.xlu0 %v1847, 32
      %v1891 = vpop.permute.xlu0 %1890
      %1892 = vrot.lane.b32.xlu0 %v1850, 32
      %v1893 = vpop.permute.xlu0 %1892
      %1894 = vrot.lane.b32.xlu0 %v1853, 32
      %v1895 = vpop.permute.xlu0 %1894
      %1896 = vrot.lane.b32.xlu0 %v1856, 32
      %v1897 = vpop.permute.xlu0 %1896
      %1898 = vrot.lane.b32.xlu0 %v1859, 32
      %v1899 = vpop.permute.xlu0 %1898
      %1900 = vrot.lane.b32.xlu0 %v1862, 32
      %v1901 = vpop.permute.xlu0 %1900
      %1902 = vrot.lane.b32.xlu0 %v1865, 32
      %v1903 = vpop.permute.xlu0 %1902
      %1904 = vrot.lane.b32.xlu0 %v1868, 32
      %v1905 = vpop.permute.xlu0 %1904
      %1906 = vrot.lane.b32.xlu0 %v1871, 32
      %v1907 = vpop.permute.xlu0 %1906
      %1908 = vrot.lane.b32.xlu0 %v1874, 32
      %v1909 = vpop.permute.xlu0 %1908
      %1910 = vrot.lane.b32.xlu0 %v1877, 32
      %v1911 = vpop.permute.xlu0 %1910
      %1912 = vrot.lane.b32.xlu0 %v1880, 32
      %v1913 = vpop.permute.xlu0 %1912
      %1914 = vrot.lane.b32.xlu0 %v1883, 32
      %v1915 = vpop.permute.xlu0 %1914
      %vm1916 = vcmask 31744
      %v1918 = vsel %vm1916, %v474, %v732
      %v1920 = vsel %vm1916, %v475, %v734
      %v1922 = vsel %vm1916, %v476, %v736
      %v1924 = vsel %vm1916, %v477, %v738
      %v1926 = vsel %vm1916, %v478, %v740
      %v1928 = vsel %vm1916, %v479, %v742
      %v1930 = vsel %vm1916, %v480, %v744
      %v1932 = vsel %vm1916, %v481, %v746
      %v1934 = vsel %vm1916, %v482, %v748
      %v1936 = vsel %vm1916, %v483, %v750
      %v1938 = vsel %vm1916, %v484, %v752
      %v1940 = vsel %vm1916, %v485, %v754
      %v1942 = vsel %vm1916, %v486, %v756
      %v1944 = vsel %vm1916, %v487, %v758
      %v1946 = vsel %vm1916, %v488, %v760
      %v1948 = vsel %vm1916, %v489, %v762
      %vm1949 = vcmask 64512
      %v1951 = vsel %vm1949, %v1918, %v861
      %v1953 = vsel %vm1949, %v1920, %v863
      %v1955 = vsel %vm1949, %v1922, %v865
      %v1957 = vsel %vm1949, %v1924, %v867
      %v1959 = vsel %vm1949, %v1926, %v869
      %v1961 = vsel %vm1949, %v1928, %v871
      %v1963 = vsel %vm1949, %v1930, %v873
      %v1965 = vsel %vm1949, %v1932, %v875
      %v1967 = vsel %vm1949, %v1934, %v877
      %v1969 = vsel %vm1949, %v1936, %v879
      %v1971 = vsel %vm1949, %v1938, %v881
      %v1973 = vsel %vm1949, %v1940, %v883
      %v1975 = vsel %vm1949, %v1942, %v885
      %v1977 = vsel %vm1949, %v1944, %v887
      %v1979 = vsel %vm1949, %v1946, %v889
      %v1981 = vsel %vm1949, %v1948, %v891
      %vm1982 = vcmask 97280
      %v1984 = vsel %vm1982, %v1951, %v973
      %v1986 = vsel %vm1982, %v1953, %v975
      %v1988 = vsel %vm1982, %v1955, %v977
      %v1990 = vsel %vm1982, %v1957, %v979
      %v1992 = vsel %vm1982, %v1959, %v981
      %v1994 = vsel %vm1982, %v1961, %v983
      %v1996 = vsel %vm1982, %v1963, %v985
      %v1998 = vsel %vm1982, %v1965, %v987
      %v2000 = vsel %vm1982, %v1967, %v989
      %v2002 = vsel %vm1982, %v1969, %v991
      %v2004 = vsel %vm1982, %v1971, %v993
      %v2006 = vsel %vm1982, %v1973, %v995
      %v2008 = vsel %vm1982, %v1975, %v997
      %v2010 = vsel %vm1982, %v1977, %v999
      %v2012 = vsel %vm1982, %v1979, %v1001
      %v2014 = vsel %vm1982, %v1981, %v1003
      %vm2015 = vcmask 130048
      %v2017 = vsel %vm2015, %v1984, %v1245
      %v2019 = vsel %vm2015, %v1986, %v1247
      %v2021 = vsel %vm2015, %v1988, %v1249
      %v2023 = vsel %vm2015, %v1990, %v1251
      %v2025 = vsel %vm2015, %v1992, %v1253
      %v2027 = vsel %vm2015, %v1994, %v1255
      %v2029 = vsel %vm2015, %v1996, %v1257
      %v2031 = vsel %vm2015, %v1998, %v1259
      %v2033 = vsel %vm2015, %v2000, %v1261
      %v2035 = vsel %vm2015, %v2002, %v1263
      %v2037 = vsel %vm2015, %v2004, %v1265
      %v2039 = vsel %vm2015, %v2006, %v1267
      %v2041 = vsel %vm2015, %v2008, %v1269
      %v2043 = vsel %vm2015, %v2010, %v1271
      %v2045 = vsel %vm2015, %v2012, %v1273
      %v2047 = vsel %vm2015, %v2014, %v1275
      %vm2048 = vcmask 162816
      %v2050 = vsel %vm2048, %v2017, %v1373
      %v2052 = vsel %vm2048, %v2019, %v1375
      %v2054 = vsel %vm2048, %v2021, %v1377
      %v2056 = vsel %vm2048, %v2023, %v1379
      %v2058 = vsel %vm2048, %v2025, %v1381
      %v2060 = vsel %vm2048, %v2027, %v1383
      %v2062 = vsel %vm2048, %v2029, %v1385
      %v2064 = vsel %vm2048, %v2031, %v1387
      %v2066 = vsel %vm2048, %v2033, %v1389
      %v2068 = vsel %vm2048, %v2035, %v1391
      %v2070 = vsel %vm2048, %v2037, %v1393
      %v2072 = vsel %vm2048, %v2039, %v1395
      %v2074 = vsel %vm2048, %v2041, %v1397
      %v2076 = vsel %vm2048, %v2043, %v1399
      %v2078 = vsel %vm2048, %v2045, %v1401
      %v2080 = vsel %vm2048, %v2047, %v1403
      %vm2081 = vcmask 195584
      %v2083 = vsel %vm2081, %v2050, %v1485
      %v2085 = vsel %vm2081, %v2052, %v1487
      %v2087 = vsel %vm2081, %v2054, %v1489
      %v2089 = vsel %vm2081, %v2056, %v1491
      %v2091 = vsel %vm2081, %v2058, %v1493
      %v2093 = vsel %vm2081, %v2060, %v1495
      %v2095 = vsel %vm2081, %v2062, %v1497
      %v2097 = vsel %vm2081, %v2064, %v1499
      %v2099 = vsel %vm2081, %v2066, %v1501
      %v2101 = vsel %vm2081, %v2068, %v1503
      %v2103 = vsel %vm2081, %v2070, %v1505
      %v2105 = vsel %vm2081, %v2072, %v1507
      %v2107 = vsel %vm2081, %v2074, %v1509
      %v2109 = vsel %vm2081, %v2076, %v1511
      %v2111 = vsel %vm2081, %v2078, %v1513
      %v2113 = vsel %vm2081, %v2080, %v1515
      %vm2114 = vcmask 228352
      %v2116 = vsel %vm2114, %v2083, %v1757
      %v2118 = vsel %vm2114, %v2085, %v1759
      %v2120 = vsel %vm2114, %v2087, %v1761
      %v2122 = vsel %vm2114, %v2089, %v1763
      %v2124 = vsel %vm2114, %v2091, %v1765
      %v2126 = vsel %vm2114, %v2093, %v1767
      %v2128 = vsel %vm2114, %v2095, %v1769
      %v2130 = vsel %vm2114, %v2097, %v1771
      %v2132 = vsel %vm2114, %v2099, %v1773
      %v2134 = vsel %vm2114, %v2101, %v1775
      %v2136 = vsel %vm2114, %v2103, %v1777
      %v2138 = vsel %vm2114, %v2105, %v1779
      %v2140 = vsel %vm2114, %v2107, %v1781
      %v2142 = vsel %vm2114, %v2109, %v1783
      %v2144 = vsel %vm2114, %v2111, %v1785
      %v2146 = vsel %vm2114, %v2113, %v1787
      %vm2147 = vcmask 261120
      %v2149 = vsel %vm2147, %v2116, %v1885
      %v2151 = vsel %vm2147, %v2118, %v1887
      %v2153 = vsel %vm2147, %v2120, %v1889
      %v2155 = vsel %vm2147, %v2122, %v1891
      %v2157 = vsel %vm2147, %v2124, %v1893
      %v2159 = vsel %vm2147, %v2126, %v1895
      %v2161 = vsel %vm2147, %v2128, %v1897
      %v2163 = vsel %vm2147, %v2130, %v1899
      %v2165 = vsel %vm2147, %v2132, %v1901
      %v2167 = vsel %vm2147, %v2134, %v1903
      %v2169 = vsel %vm2147, %v2136, %v1905
      %v2171 = vsel %vm2147, %v2138, %v1907
      %v2173 = vsel %vm2147, %v2140, %v1909
      %v2175 = vsel %vm2147, %v2142, %v1911
      %v2177 = vsel %vm2147, %v2144, %v1913
      %v2179 = vsel %vm2147, %v2146, %v1915
      %v2180 = vld [vmem:[%s1] sm:$0xf]
      %v2181 = vld [vmem:[%s1 + $0x4] sm:$0xf]
      %v2182 = vld [vmem:[%s1 + $0x8] sm:$0xf]
      %v2183 = vld [vmem:[%s1 + $0xc] sm:$0xf]
      %v2184 = vld [vmem:[%s1 + $0x10] sm:$0x3]
      %v2190 = vunpack.c.l.b16 %v2180
      %v2191 = vunpack.c.l.b16 %v2181
      %v2192 = vunpack.c.l.b16 %v2182
      %v2193 = vunpack.c.l.b16 %v2183
      %v2194 = vunpack.c.l.b16 %v2184
      %v2195 = vpack.c.b16 %v2191, %v2190
      %v2196 = vpack.c.b16 %v2193, %v2192
      %v2197 = vpack.c.b16 %v2194, %v2194
      %vm2200 = vcmask 293888
      %v2201 = vsel %vm2200, %v2149, 0
      %v2203 = vsel %vm2200, %v2151, 0
      %v2205 = vsel %vm2200, %v2153, 0
      %v2207 = vsel %vm2200, %v2155, 0
      %v2209 = vsel %vm2200, %v2157, 0
      %v2211 = vsel %vm2200, %v2159, 0
      %v2213 = vsel %vm2200, %v2161, 0
      %v2215 = vsel %vm2200, %v2163, 0
      %v2217 = vsel %vm2200, %v2165, 0
      %v2219 = vsel %vm2200, %v2167, 0
      %v2221 = vsel %vm2200, %v2169, 0
      %v2223 = vsel %vm2200, %v2171, 0
      %v2225 = vsel %vm2200, %v2173, 0
      %v2227 = vsel %vm2200, %v2175, 0
      %v2229 = vsel %vm2200, %v2177, 0
      %v2231 = vsel %vm2200, %v2179, 0
      %vm2233 = vcmask 1041408
      %v2235 = vsel %vm2233, %v2197, 0
      %2237 = vmatprep.subr.bf16.mxu0 0
      %2238 = vmatpush1.bf16.msra.mxu0 0
      %2239 = vmatprep.subr.bf16.mxu0 0
      %2240 = vmatpush1.bf16.msra.mxu0 0
      %2241 = vmatprep.subr.bf16.mxu0 0
      %2242 = vmatpush1.bf16.msra.mxu0 0
      %2243 = vmatprep.subr.bf16.mxu0 0
      %2244 = vmatpush1.bf16.msra.mxu0 0
      %2245 = vmatprep.subr.bf16.mxu0 0
      %2246 = vmatpush1.bf16.msra.mxu0 0
      %2247 = vmatprep.subr.bf16.mxu0 0
      %2248 = vmatpush1.bf16.msra.mxu0 %v2235
      %2249 = vmatprep.subr.bf16.mxu0 0
      %2250 = vmatpush1.bf16.msra.mxu0 %v2196
      %2251 = vmatprep.subr.bf16.mxu0 0
      %2252 = vmatpush1.bf16.msra.mxu0 %v2195
      %2253 = vmatprep.subr.bf16.mxu0 0
      %2254 = vmatpush2.bf16.msra.mxu0 0
      %2255 = vmatprep.subr.bf16.mxu0 0
      %2256 = vmatpush2.bf16.msra.mxu0 0
      %2257 = vmatprep.subr.bf16.mxu0 0
      %2258 = vmatpush2.bf16.msra.mxu0 0
      %2259 = vmatprep.subr.bf16.mxu0 0
      %2260 = vmatpush2.bf16.msra.mxu0 0
      %2261 = vmatprep.subr.bf16.mxu0 0
      %2262 = vmatpush2.bf16.msra.mxu0 0
      %2263 = vmatprep.subr.bf16.mxu0 0
      %2264 = vmatpush2.bf16.msra.mxu0 0
      %2265 = vmatprep.subr.bf16.mxu0 0
      %2266 = vmatpush2.bf16.msra.mxu0 0
      %2267 = vmatprep.subr.bf16.mxu0 0
      %2268 = vmatpush2.bf16.msra.mxu0 0
      %2269 = vmatprep.mubr.bf16.mxu0 0
      %2270 = vmatmul.mubr.bf16.gmra.mxu0 %v2201
      %v2271 = vpop.f32.mrf.mxu0
      %v2272 = vadd.f32 0.0, %v2271
      %v2273 = vpop.f32.mrf.mxu0
      %v2274 = vpop.f32.mrf.mxu0
      %v2275 = vadd.f32 0.0, %v2274
      %v2276 = vpop.f32.mrf.mxu0
      %2277 = vmatprep.mubr.bf16.mxu0 0
      %2278 = vmatmul.mubr.bf16.gmra.mxu0 %v2203
      %v2279 = vpop.f32.mrf.mxu0
      %v2280 = vadd.f32 0.0, %v2279
      %v2281 = vpop.f32.mrf.mxu0
      %v2282 = vpop.f32.mrf.mxu0
      %v2283 = vadd.f32 0.0, %v2282
      %v2284 = vpop.f32.mrf.mxu0
      %2285 = vmatprep.mubr.bf16.mxu0 0
      %2286 = vmatmul.mubr.bf16.gmra.mxu0 %v2205
      %v2287 = vpop.f32.mrf.mxu0
      %v2288 = vadd.f32 0.0, %v2287
      %v2289 = vpop.f32.mrf.mxu0
      %v2290 = vpop.f32.mrf.mxu0
      %v2291 = vadd.f32 0.0, %v2290
      %v2292 = vpop.f32.mrf.mxu0
      %2293 = vmatprep.mubr.bf16.mxu0 0
      %2294 = vmatmul.mubr.bf16.gmra.mxu0 %v2207
      %v2295 = vpop.f32.mrf.mxu0
      %v2296 = vadd.f32 0.0, %v2295
      %v2297 = vpop.f32.mrf.mxu0
      %v2298 = vpop.f32.mrf.mxu0
      %v2299 = vadd.f32 0.0, %v2298
      %v2300 = vpop.f32.mrf.mxu0
      %2301 = vmatprep.mubr.bf16.mxu0 0
      %2302 = vmatmul.mubr.bf16.gmra.mxu0 %v2209
      %v2303 = vpop.f32.mrf.mxu0
      %v2304 = vadd.f32 0.0, %v2303
      %v2305 = vpop.f32.mrf.mxu0
      %v2306 = vpop.f32.mrf.mxu0
      %v2307 = vadd.f32 0.0, %v2306
      %v2308 = vpop.f32.mrf.mxu0
      %2309 = vmatprep.mubr.bf16.mxu0 0
      %2310 = vmatmul.mubr.bf16.gmra.mxu0 %v2211
      %v2311 = vpop.f32.mrf.mxu0
      %v2312 = vadd.f32 0.0, %v2311
      %v2313 = vpop.f32.mrf.mxu0
      %v2314 = vpop.f32.mrf.mxu0
      %v2315 = vadd.f32 0.0, %v2314
      %v2316 = vpop.f32.mrf.mxu0
      %2317 = vmatprep.mubr.bf16.mxu0 0
      %2318 = vmatmul.mubr.bf16.gmra.mxu0 %v2213
      %v2319 = vpop.f32.mrf.mxu0
      %v2320 = vadd.f32 0.0, %v2319
      %v2321 = vpop.f32.mrf.mxu0
      %v2322 = vpop.f32.mrf.mxu0
      %v2323 = vadd.f32 0.0, %v2322
      %v2324 = vpop.f32.mrf.mxu0
      %2325 = vmatprep.mubr.bf16.mxu0 0
      %2326 = vmatmul.mubr.bf16.gmra.mxu0 %v2215
      %v2327 = vpop.f32.mrf.mxu0
      %v2328 = vadd.f32 0.0, %v2327
      %v2329 = vpop.f32.mrf.mxu0
      %v2330 = vpop.f32.mrf.mxu0
      %v2331 = vadd.f32 0.0, %v2330
      %v2332 = vpop.f32.mrf.mxu0
      %2333 = vmatprep.mubr.bf16.mxu0 0
      %2334 = vmatmul.mubr.bf16.gmra.mxu0 %v2217
      %v2335 = vpop.f32.mrf.mxu0
      %v2336 = vadd.f32 0.0, %v2335
      %v2337 = vpop.f32.mrf.mxu0
      %v2338 = vpop.f32.mrf.mxu0
      %v2339 = vadd.f32 0.0, %v2338
      %v2340 = vpop.f32.mrf.mxu0
      %2341 = vmatprep.mubr.bf16.mxu0 0
      %2342 = vmatmul.mubr.bf16.gmra.mxu0 %v2219
      %v2343 = vpop.f32.mrf.mxu0
      %v2344 = vadd.f32 0.0, %v2343
      %v2345 = vpop.f32.mrf.mxu0
      %v2346 = vpop.f32.mrf.mxu0
      %v2347 = vadd.f32 0.0, %v2346
      %v2348 = vpop.f32.mrf.mxu0
      %2349 = vmatprep.mubr.bf16.mxu0 0
      %2350 = vmatmul.mubr.bf16.gmra.mxu0 %v2221
      %v2351 = vpop.f32.mrf.mxu0
      %v2352 = vadd.f32 0.0, %v2351
      %v2353 = vpop.f32.mrf.mxu0
      %v2354 = vpop.f32.mrf.mxu0
      %v2355 = vadd.f32 0.0, %v2354
      %v2356 = vpop.f32.mrf.mxu0
      %2357 = vmatprep.mubr.bf16.mxu0 0
      %2358 = vmatmul.mubr.bf16.gmra.mxu0 %v2223
      %v2359 = vpop.f32.mrf.mxu0
      %v2360 = vadd.f32 0.0, %v2359
      %v2361 = vpop.f32.mrf.mxu0
      %v2362 = vpop.f32.mrf.mxu0
      %v2363 = vadd.f32 0.0, %v2362
      %v2364 = vpop.f32.mrf.mxu0
      %2365 = vmatprep.mubr.bf16.mxu0 0
      %2366 = vmatmul.mubr.bf16.gmra.mxu0 %v2225
      %v2367 = vpop.f32.mrf.mxu0
      %v2368 = vadd.f32 0.0, %v2367
      %v2369 = vpop.f32.mrf.mxu0
      %v2370 = vpop.f32.mrf.mxu0
      %v2371 = vadd.f32 0.0, %v2370
      %v2372 = vpop.f32.mrf.mxu0
      %2373 = vmatprep.mubr.bf16.mxu0 0
      %2374 = vmatmul.mubr.bf16.gmra.mxu0 %v2227
      %v2375 = vpop.f32.mrf.mxu0
      %v2376 = vadd.f32 0.0, %v2375
      %v2377 = vpop.f32.mrf.mxu0
      %v2378 = vpop.f32.mrf.mxu0
      %v2379 = vadd.f32 0.0, %v2378
      %v2380 = vpop.f32.mrf.mxu0
      %2381 = vmatprep.mubr.bf16.mxu0 0
      %2382 = vmatmul.mubr.bf16.gmra.mxu0 %v2229
      %v2383 = vpop.f32.mrf.mxu0
      %v2384 = vadd.f32 0.0, %v2383
      %v2385 = vpop.f32.mrf.mxu0
      %v2386 = vpop.f32.mrf.mxu0
      %v2387 = vadd.f32 0.0, %v2386
      %v2388 = vpop.f32.mrf.mxu0
      %2389 = vmatprep.mubr.bf16.mxu0 0
      %2390 = vmatmul.mubr.bf16.gmra.mxu0 %v2231
      %v2391 = vpop.f32.mrf.mxu0
      %v2392 = vadd.f32 0.0, %v2391
      %v2393 = vpop.f32.mrf.mxu0
      %v2394 = vpop.f32.mrf.mxu0
      %v2395 = vadd.f32 0.0, %v2394
      %v2396 = vpop.f32.mrf.mxu0
      %2397 = vdwg.mxu0
      %v2398 = vpack.c.bf16 %v2275, %v2272
      %v2399 = vpack.c.bf16 %v2283, %v2280
      %v2400 = vpack.c.bf16 %v2291, %v2288
      %v2401 = vpack.c.bf16 %v2299, %v2296
      %v2402 = vpack.c.bf16 %v2307, %v2304
      %v2403 = vpack.c.bf16 %v2315, %v2312
      %v2404 = vpack.c.bf16 %v2323, %v2320
      %v2405 = vpack.c.bf16 %v2331, %v2328
      %v2406 = vpack.c.bf16 %v2339, %v2336
      %v2407 = vpack.c.bf16 %v2347, %v2344
      %v2408 = vpack.c.bf16 %v2355, %v2352
      %v2409 = vpack.c.bf16 %v2363, %v2360
      %v2410 = vpack.c.bf16 %v2371, %v2368
      %v2411 = vpack.c.bf16 %v2379, %v2376
      %v2412 = vpack.c.bf16 %v2387, %v2384
      %v2413 = vpack.c.bf16 %v2395, %v2392
      %v2430 = vunpack.c.l.b16 %v2398
      %v2431 = vunpack.c.h.b16 %v2398
      %v2432 = vunpack.c.l.b16 %v2399
      %v2433 = vunpack.c.h.b16 %v2399
      %v2434 = vunpack.c.l.b16 %v2400
      %v2435 = vunpack.c.h.b16 %v2400
      %v2436 = vunpack.c.l.b16 %v2401
      %v2437 = vunpack.c.h.b16 %v2401
      %v2438 = vunpack.c.l.b16 %v2402
      %v2439 = vunpack.c.h.b16 %v2402
      %v2440 = vunpack.c.l.b16 %v2403
      %v2441 = vunpack.c.h.b16 %v2403
      %v2442 = vunpack.c.l.b16 %v2404
      %v2443 = vunpack.c.h.b16 %v2404
      %v2444 = vunpack.c.l.b16 %v2405
      %v2445 = vunpack.c.h.b16 %v2405
      %v2446 = vunpack.c.l.b16 %v2406
      %v2447 = vunpack.c.h.b16 %v2406
      %v2448 = vunpack.c.l.b16 %v2407
      %v2449 = vunpack.c.h.b16 %v2407
      %v2450 = vunpack.c.l.b16 %v2408
      %v2451 = vunpack.c.h.b16 %v2408
      %v2452 = vunpack.c.l.b16 %v2409
      %v2453 = vunpack.c.h.b16 %v2409
      %v2454 = vunpack.c.l.b16 %v2410
      %v2455 = vunpack.c.h.b16 %v2410
      %v2456 = vunpack.c.l.b16 %v2411
      %v2457 = vunpack.c.h.b16 %v2411
      %v2458 = vunpack.c.l.b16 %v2412
      %v2459 = vunpack.c.h.b16 %v2412
      %v2460 = vunpack.c.l.b16 %v2413
      %v2461 = vunpack.c.h.b16 %v2413
      %v2462 = vpack.c.b16 %v2430, %v2430
      %v2463 = vpack.c.b16 %v2431, %v2431
      %v2464 = vpack.c.b16 %v2432, %v2432
      %v2465 = vpack.c.b16 %v2433, %v2433
      %v2466 = vpack.c.b16 %v2434, %v2434
      %v2467 = vpack.c.b16 %v2435, %v2435
      %v2468 = vpack.c.b16 %v2436, %v2436
      %v2469 = vpack.c.b16 %v2437, %v2437
      %v2470 = vpack.c.b16 %v2438, %v2438
      %v2471 = vpack.c.b16 %v2439, %v2439
      %v2472 = vpack.c.b16 %v2440, %v2440
      %v2473 = vpack.c.b16 %v2441, %v2441
      %v2474 = vpack.c.b16 %v2442, %v2442
      %v2475 = vpack.c.b16 %v2443, %v2443
      %v2476 = vpack.c.b16 %v2444, %v2444
      %v2477 = vpack.c.b16 %v2445, %v2445
      %v2478 = vpack.c.b16 %v2446, %v2446
      %v2479 = vpack.c.b16 %v2447, %v2447
      %v2480 = vpack.c.b16 %v2448, %v2448
      %v2481 = vpack.c.b16 %v2449, %v2449
      %v2482 = vpack.c.b16 %v2450, %v2450
      %v2483 = vpack.c.b16 %v2451, %v2451
      %v2484 = vpack.c.b16 %v2452, %v2452
      %v2485 = vpack.c.b16 %v2453, %v2453
      %v2486 = vpack.c.b16 %v2454, %v2454
      %v2487 = vpack.c.b16 %v2455, %v2455
      %v2488 = vpack.c.b16 %v2456, %v2456
      %v2489 = vpack.c.b16 %v2457, %v2457
      %v2490 = vpack.c.b16 %v2458, %v2458
      %v2491 = vpack.c.b16 %v2459, %v2459
      %v2492 = vpack.c.b16 %v2460, %v2460
      %v2493 = vpack.c.b16 %v2461, %v2461
      %vm2526 = vcmask 60416
      %2527 = vst.msk [vmem:[%s208] sm:$0xf] %vm2526, %v2462
      %2528 = vst.msk [vmem:[%s208 + $0x4] sm:$0xf] %vm2526, %v2463
      %2529 = vst.msk [vmem:[%s208 + $0x8] sm:$0xf] %vm2526, %v2464
      %2530 = vst.msk [vmem:[%s208 + $0xc] sm:$0xf] %vm2526, %v2465
      %2531 = vst.msk [vmem:[%s208 + $0x10] sm:$0xf] %vm2526, %v2466
      %2532 = vst.msk [vmem:[%s208 + $0x14] sm:$0xf] %vm2526, %v2467
      %2533 = vst.msk [vmem:[%s208 + $0x18] sm:$0xf] %vm2526, %v2468
      %2534 = vst.msk [vmem:[%s208 + $0x1c] sm:$0xf] %vm2526, %v2469
      %2535 = vst.msk [vmem:[%s208 + $0x20] sm:$0xf] %vm2526, %v2470
      %2536 = vst.msk [vmem:[%s208 + $0x24] sm:$0xf] %vm2526, %v2471
      %2537 = vst.msk [vmem:[%s208 + $0x28] sm:$0xf] %vm2526, %v2472
      %2538 = vst.msk [vmem:[%s208 + $0x2c] sm:$0xf] %vm2526, %v2473
      %2539 = vst.msk [vmem:[%s208 + $0x30] sm:$0xf] %vm2526, %v2474
      %2540 = vst.msk [vmem:[%s208 + $0x34] sm:$0xf] %vm2526, %v2475
      %2541 = vst.msk [vmem:[%s208 + $0x38] sm:$0xf] %vm2526, %v2476
      %2542 = vst.msk [vmem:[%s208 + $0x3c] sm:$0xf] %vm2526, %v2477
      %2543 = vst.msk [vmem:[%s208 + $0x40] sm:$0xf] %vm2526, %v2478
      %2544 = vst.msk [vmem:[%s208 + $0x44] sm:$0xf] %vm2526, %v2479
      %2545 = vst.msk [vmem:[%s208 + $0x48] sm:$0xf] %vm2526, %v2480
      %2546 = vst.msk [vmem:[%s208 + $0x4c] sm:$0xf] %vm2526, %v2481
      %2547 = vst.msk [vmem:[%s208 + $0x50] sm:$0xf] %vm2526, %v2482
      %2548 = vst.msk [vmem:[%s208 + $0x54] sm:$0xf] %vm2526, %v2483
      %2549 = vst.msk [vmem:[%s208 + $0x58] sm:$0xf] %vm2526, %v2484
      %2550 = vst.msk [vmem:[%s208 + $0x5c] sm:$0xf] %vm2526, %v2485
      %2551 = vst.msk [vmem:[%s208 + $0x60] sm:$0xf] %vm2526, %v2486
      %2552 = vst.msk [vmem:[%s208 + $0x64] sm:$0xf] %vm2526, %v2487
      %2553 = vst.msk [vmem:[%s208 + $0x68] sm:$0xf] %vm2526, %v2488
      %2554 = vst.msk [vmem:[%s208 + $0x6c] sm:$0xf] %vm2526, %v2489
      %2555 = vst.msk [vmem:[%s208 + $0x70] sm:$0xf] %vm2526, %v2490
      %2556 = vst.msk [vmem:[%s208 + $0x74] sm:$0xf] %vm2526, %v2491
      %2557 = vst.msk [vmem:[%s208 + $0x78] sm:$0xf] %vm2526, %v2492
      %2558 = vst.msk [vmem:[%s208 + $0x7c] sm:$0xf] %vm2526, %v2493
      %v2559 = vsel %vm1949, %v2272, 0.0
      %v2560 = vsel %vm1949, %v2275, 0.0
      %v2561 = vadd.f32 %v2559, %v2560
      %v2562 = vsel %vm1949, %v2280, 0.0
      %v2563 = vadd.f32 %v2561, %v2562
      %v2564 = vsel %vm1949, %v2283, 0.0
      %v2565 = vadd.f32 %v2563, %v2564
      %v2566 = vsel %vm1949, %v2288, 0.0
      %v2567 = vadd.f32 %v2565, %v2566
      %v2568 = vsel %vm1949, %v2291, 0.0
      %v2569 = vadd.f32 %v2567, %v2568
      %v2570 = vsel %vm1949, %v2296, 0.0
      %v2571 = vadd.f32 %v2569, %v2570
      %v2572 = vsel %vm1949, %v2299, 0.0
      %v2573 = vadd.f32 %v2571, %v2572
      %v2574 = vsel %vm1949, %v2304, 0.0
      %v2575 = vadd.f32 %v2573, %v2574
      %v2576 = vsel %vm1949, %v2307, 0.0
      %v2577 = vadd.f32 %v2575, %v2576
      %v2578 = vsel %vm1949, %v2312, 0.0
      %v2579 = vadd.f32 %v2577, %v2578
      %v2580 = vsel %vm1949, %v2315, 0.0
      %v2581 = vadd.f32 %v2579, %v2580
      %v2582 = vsel %vm1949, %v2320, 0.0
      %v2583 = vadd.f32 %v2581, %v2582
      %v2584 = vsel %vm1949, %v2323, 0.0
      %v2585 = vadd.f32 %v2583, %v2584
      %v2586 = vsel %vm1949, %v2328, 0.0
      %v2587 = vadd.f32 %v2585, %v2586
      %v2588 = vsel %vm1949, %v2331, 0.0
      %v2589 = vadd.f32 %v2587, %v2588
      %v2590 = vsel %vm1949, %v2336, 0.0
      %v2591 = vadd.f32 %v2589, %v2590
      %v2592 = vsel %vm1949, %v2339, 0.0
      %v2593 = vadd.f32 %v2591, %v2592
      %v2594 = vsel %vm1949, %v2344, 0.0
      %v2595 = vadd.f32 %v2593, %v2594
      %v2596 = vsel %vm1949, %v2347, 0.0
      %v2597 = vadd.f32 %v2595, %v2596
      %v2598 = vsel %vm1949, %v2352, 0.0
      %v2599 = vadd.f32 %v2597, %v2598
      %v2600 = vsel %vm1949, %v2355, 0.0
      %v2601 = vadd.f32 %v2599, %v2600
      %v2602 = vsel %vm1949, %v2360, 0.0
      %v2603 = vadd.f32 %v2601, %v2602
      %v2604 = vsel %vm1949, %v2363, 0.0
      %v2605 = vadd.f32 %v2603, %v2604
      %v2606 = vsel %vm1949, %v2368, 0.0
      %v2607 = vadd.f32 %v2605, %v2606
      %v2608 = vsel %vm1949, %v2371, 0.0
      %v2609 = vadd.f32 %v2607, %v2608
      %v2610 = vsel %vm1949, %v2376, 0.0
      %v2611 = vadd.f32 %v2609, %v2610
      %v2612 = vsel %vm1949, %v2379, 0.0
      %v2613 = vadd.f32 %v2611, %v2612
      %v2614 = vsel %vm1949, %v2384, 0.0
      %v2615 = vadd.f32 %v2613, %v2614
      %v2616 = vsel %vm1949, %v2387, 0.0
      %v2617 = vadd.f32 %v2615, %v2616
      %v2618 = vsel %vm1949, %v2392, 0.0
      %v2619 = vadd.f32 %v2617, %v2618
      %v2620 = vsel %vm1949, %v2395, 0.0
      %v2621 = vadd.f32 %v2619, %v2620
      %v2622 = vrot.slane %v2621, 4
      %v2623 = vadd.f32 %v2621, %v2622
      %v2624 = vrot.slane %v2623, 2
      %v2625 = vadd.f32 %v2623, %v2624
      %v2626 = vrot.slane %v2625, 1
      %v2627 = vadd.f32 %v2625, %v2626
      %vm2628 = vcmask 57344
      %2629 = vst.msk [vmem:[%s211] sm:$0x1] %vm2628, %v2627
      %v2630 = vmul.f32 %v2272, %v2272
      %v2631 = vmul.f32 %v2275, %v2275
      %v2632 = vmul.f32 %v2280, %v2280
      %v2633 = vmul.f32 %v2283, %v2283
      %v2634 = vmul.f32 %v2288, %v2288
      %v2635 = vmul.f32 %v2291, %v2291
      %v2636 = vmul.f32 %v2296, %v2296
      %v2637 = vmul.f32 %v2299, %v2299
      %v2638 = vmul.f32 %v2304, %v2304
      %v2639 = vmul.f32 %v2307, %v2307
      %v2640 = vmul.f32 %v2312, %v2312
      %v2641 = vmul.f32 %v2315, %v2315
      %v2642 = vmul.f32 %v2320, %v2320
      %v2643 = vmul.f32 %v2323, %v2323
      %v2644 = vmul.f32 %v2328, %v2328
      %v2645 = vmul.f32 %v2331, %v2331
      %v2646 = vmul.f32 %v2336, %v2336
      %v2647 = vmul.f32 %v2339, %v2339
      %v2648 = vmul.f32 %v2344, %v2344
      %v2649 = vmul.f32 %v2347, %v2347
      %v2650 = vmul.f32 %v2352, %v2352
      %v2651 = vmul.f32 %v2355, %v2355
      %v2652 = vmul.f32 %v2360, %v2360
      %v2653 = vmul.f32 %v2363, %v2363
      %v2654 = vmul.f32 %v2368, %v2368
      %v2655 = vmul.f32 %v2371, %v2371
      %v2656 = vmul.f32 %v2376, %v2376
      %v2657 = vmul.f32 %v2379, %v2379
      %v2658 = vmul.f32 %v2384, %v2384
      %v2659 = vmul.f32 %v2387, %v2387
      %v2660 = vmul.f32 %v2392, %v2392
      %v2661 = vmul.f32 %v2395, %v2395
      %v2662 = vsel %vm1949, %v2630, 0.0
      %v2663 = vsel %vm1949, %v2631, 0.0
      %v2664 = vadd.f32 %v2662, %v2663
      %v2665 = vsel %vm1949, %v2632, 0.0
      %v2666 = vadd.f32 %v2664, %v2665
      %v2667 = vsel %vm1949, %v2633, 0.0
      %v2668 = vadd.f32 %v2666, %v2667
      %v2669 = vsel %vm1949, %v2634, 0.0
      %v2670 = vadd.f32 %v2668, %v2669
      %v2671 = vsel %vm1949, %v2635, 0.0
      %v2672 = vadd.f32 %v2670, %v2671
      %v2673 = vsel %vm1949, %v2636, 0.0
      %v2674 = vadd.f32 %v2672, %v2673
      %v2675 = vsel %vm1949, %v2637, 0.0
      %v2676 = vadd.f32 %v2674, %v2675
      %v2677 = vsel %vm1949, %v2638, 0.0
      %v2678 = vadd.f32 %v2676, %v2677
      %v2679 = vsel %vm1949, %v2639, 0.0
      %v2680 = vadd.f32 %v2678, %v2679
      %v2681 = vsel %vm1949, %v2640, 0.0
      %v2682 = vadd.f32 %v2680, %v2681
      %v2683 = vsel %vm1949, %v2641, 0.0
      %v2684 = vadd.f32 %v2682, %v2683
      %v2685 = vsel %vm1949, %v2642, 0.0
      %v2686 = vadd.f32 %v2684, %v2685
      %v2687 = vsel %vm1949, %v2643, 0.0
      %v2688 = vadd.f32 %v2686, %v2687
      %v2689 = vsel %vm1949, %v2644, 0.0
      %v2690 = vadd.f32 %v2688, %v2689
      %v2691 = vsel %vm1949, %v2645, 0.0
      %v2692 = vadd.f32 %v2690, %v2691
      %v2693 = vsel %vm1949, %v2646, 0.0
      %v2694 = vadd.f32 %v2692, %v2693
      %v2695 = vsel %vm1949, %v2647, 0.0
      %v2696 = vadd.f32 %v2694, %v2695
      %v2697 = vsel %vm1949, %v2648, 0.0
      %v2698 = vadd.f32 %v2696, %v2697
      %v2699 = vsel %vm1949, %v2649, 0.0
      %v2700 = vadd.f32 %v2698, %v2699
      %v2701 = vsel %vm1949, %v2650, 0.0
      %v2702 = vadd.f32 %v2700, %v2701
      %v2703 = vsel %vm1949, %v2651, 0.0
      %v2704 = vadd.f32 %v2702, %v2703
      %v2705 = vsel %vm1949, %v2652, 0.0
      %v2706 = vadd.f32 %v2704, %v2705
      %v2707 = vsel %vm1949, %v2653, 0.0
      %v2708 = vadd.f32 %v2706, %v2707
      %v2709 = vsel %vm1949, %v2654, 0.0
      %v2710 = vadd.f32 %v2708, %v2709
      %v2711 = vsel %vm1949, %v2655, 0.0
      %v2712 = vadd.f32 %v2710, %v2711
      %v2713 = vsel %vm1949, %v2656, 0.0
      %v2714 = vadd.f32 %v2712, %v2713
      %v2715 = vsel %vm1949, %v2657, 0.0
      %v2716 = vadd.f32 %v2714, %v2715
      %v2717 = vsel %vm1949, %v2658, 0.0
      %v2718 = vadd.f32 %v2716, %v2717
      %v2719 = vsel %vm1949, %v2659, 0.0
      %v2720 = vadd.f32 %v2718, %v2719
      %v2721 = vsel %vm1949, %v2660, 0.0
      %v2722 = vadd.f32 %v2720, %v2721
      %v2723 = vsel %vm1949, %v2661, 0.0
      %v2724 = vadd.f32 %v2722, %v2723
      %v2725 = vrot.slane %v2724, 4
      %v2726 = vadd.f32 %v2724, %v2725
      %v2727 = vrot.slane %v2726, 2
      %v2728 = vadd.f32 %v2726, %v2727
      %v2729 = vrot.slane %v2728, 1
      %v2730 = vadd.f32 %v2728, %v2729
      %2731 = vst.msk [vmem:[%s214] sm:$0x1] %vm2628, %v2730
      %p2732 = scmp.lt.s32.totalorder %s16, 1
      %s2733 = scalar_select %p2732, %s16, 1
      %s2734 = smul.addr %s2733, 32
      %s2735 = smul.addr %s2734, 4
      %s2736 = scalar_lea.vmem %s2, %s2735
      %p2737 = scmp.lt.s32.totalorder %s16, 1
      %s2738 = scalar_select %p2737, %s16, 1
      %s2739 = scalar_lea.vmem %s3, %s2738
      %p2740 = scmp.lt.s32.totalorder %s16, 1
      %s2741 = scalar_select %p2740, %s16, 1
      %s2742 = scalar_lea.vmem %s4, %s2741
      // Predicated region
      $region29: #{convx_forward.2} parent=27 // pred_check
        %p2743 = pneg %p81
      $region30: #{convx_forward.2} parent=27 // pred_check_branch
        %2745 = sbr.rel (%p2743) target = $region32
      $region31: #{convx_forward.2} parent=27 // pred_region
        _
      $region32: #{convx_forward.2} parent=27 // pred_fallthru
        _
      // Predicated region
      $region33: #{convx_forward.2} parent=27 // pred_check
        %p2746 = pneg %p107
      $region34: #{convx_forward.2} parent=27 // pred_check_branch
        %2748 = sbr.rel (%p2746) target = $region36
      $region35: #{convx_forward.2} parent=27 // pred_region
        _
      $region36: #{convx_forward.2} parent=27 // pred_fallthru
        _
      // Predicated region
      $region37: #{convx_forward.2} parent=27 // pred_check
        %p2749 = pneg %p133
      $region38: #{convx_forward.2} parent=27 // pred_check_branch
        %2751 = sbr.rel (%p2749) target = $region40
      $region39: #{convx_forward.2} parent=27 // pred_region
        _
      $region40: #{convx_forward.2} parent=27 // pred_fallthru
        _
    $region28: #{convx_forward.2} parent=5 // pred_fallthru
      _
    %p2752 = scmp.le.s32.totalorder 2, %s11
    // Predicated region
    $region41: #{convx_forward.2} parent=5 // pred_check
      %p2753 = pneg %p2752
    $region42: #{convx_forward.2} parent=5 // pred_check_branch
      %2755 = sbr.rel (%p2753) target = $region44
    $region43: #{convx_forward.2} parent=5 // pred_region
      %s2756 = ssub.s32 %s11, 2
      // Predicated region
      $region45: #{convx_forward.2} parent=43 // pred_check
        %p2757 = pneg %p87
      $region46: #{convx_forward.2} parent=43 // pred_check_branch
        %2759 = sbr.rel (%p2757) target = $region48
      $region47: #{convx_forward.2} parent=43 // pred_region
        %p2760 = scmp.lt.s32.totalorder %s17, 1
        %s2761 = scalar_select %p2760, %s17, 1
        %s2762 = smul.addr %s2761, 32
        %s2763 = smul.addr %s2762, 4
        %s2764 = scalar_lea.vmem %s2, %s2763
      $region48: #{convx_forward.2} parent=43 // pred_fallthru
        _
      // Predicated region
      $region49: #{convx_forward.2} parent=43 // pred_check
        %p2765 = pneg %p113
      $region50: #{convx_forward.2} parent=43 // pred_check_branch
        %2767 = sbr.rel (%p2765) target = $region52
      $region51: #{convx_forward.2} parent=43 // pred_region
        %p2768 = scmp.lt.s32.totalorder %s17, 1
        %s2769 = scalar_select %p2768, %s17, 1
        %s2770 = scalar_lea.vmem %s3, %s2769
      $region52: #{convx_forward.2} parent=43 // pred_fallthru
        _
      // Predicated region
      $region53: #{convx_forward.2} parent=43 // pred_check
        %p2771 = pneg %p139
      $region54: #{convx_forward.2} parent=43 // pred_check_branch
        %2773 = sbr.rel (%p2771) target = $region56
      $region55: #{convx_forward.2} parent=43 // pred_region
        %p2774 = scmp.lt.s32.totalorder %s17, 1
        %s2775 = scalar_select %p2774, %s17, 1
        %s2776 = scalar_lea.vmem %s4, %s2775
      $region56: #{convx_forward.2} parent=43 // pred_fallthru
        _
    $region44: #{convx_forward.2} parent=5 // pred_fallthru
      _
  $region6: #{convx_forward.2} parent=0 // loop_footer
    %s15 = sadd.s32 1, %s11
  $region7: #{convx_forward.2} parent=0 // loop_footer_branch
    %10 = sbr.rel target = $region3
  $region8: #{convx_forward.2} parent=0 // loop_exit
    _

</llo_original>
